<compile_context>
chip_gen: v7x
topology: tpu7x:2x2x1
jax: 0.10.0
libtpu: 0.0.40
codegen_flags: <defaults>
</compile_context>

<pallas_src>
import jax
import jax.numpy as jnp
from jax import lax
from jax.experimental import pallas as pl
from jax.experimental.pallas import tpu as pltpu


# ------------------------------------------------------------------ kernel ---

def _bilstm_rec_kernel(gx_ref, whh_ref, out_ref, h_ref, c_ref):
    """Recurrent part of one direction of one bidirectional LSTM layer.

    Grid: (direction d, batch tile, time block).
      gx_ref : [TT, tb, 4H]  f32   precomputed  x @ W_ih + b  for this block
               (for d==1 this is the time-reversed block)
      whh_ref: [H, 4H]       compute dtype (bf16/f32), VMEM-resident per direction
      out_ref: [TT, tb, H]   hidden states for this block
      h_ref/c_ref: [tb, H]   f32 VMEM scratch -- recurrent carry across time blocks
    """
    d = pl.program_id(0)
    t = pl.program_id(2)

    @pl.when(t == 0)
    def _():  # fresh recurrence for every (direction, batch tile)
        h_ref[...] = jnp.zeros_like(h_ref)
        c_ref[...] = jnp.zeros_like(c_ref)

    TT = gx_ref.shape[0]
    H = h_ref.shape[-1]
    whh = whh_ref[...]                      # loaded once per grid step

    def step(s, carry):
        h, c = carry
        # forward direction walks the block 0..TT-1, backward walks TT-1..0
        ls = s + d * (TT - 1 - 2 * s)
        gates = gx_ref[ls] + jnp.dot(h.astype(whh.dtype), whh,
                                     preferred_element_type=jnp.float32)
        # gate layout (i, f, o, g): one contiguous sigmoid + one contiguous tanh
        sg = jax.nn.sigmoid(gates[:, :3 * H])
        g = jnp.tanh(gates[:, 3 * H:])
        i = sg[:, 0 * H:1 * H]
        f = sg[:, 1 * H:2 * H]
        o = sg[:, 2 * H:3 * H]
        c = f * c + i * g
        h = o * jnp.tanh(c)
        out_ref[ls] = h.astype(out_ref.dtype)
        return h, c

    h, c = lax.fori_loop(0, TT, step, (h_ref[...], c_ref[...]),
                         unroll=(TT <= 32))
    h_ref[...] = h
    c_ref[...] = c


# ----------------------------------------------------------------- helpers ---

def _vmem_limit_bytes():
    """~85% of physical VMEM, capped at 110 MiB (v5e/v6e ~110 MiB, v7x ~54 MiB)."""
    cap = 64 * 1024 * 1024
    try:
        cap = int(getattr(pltpu.get_tpu_info(), "vmem_capacity_bytes", cap) or cap)
    except Exception:
        pass
    return min(int(cap * 0.85), 110 * 1024 * 1024)


def _default_time_block(T):
    """Largest divisor of T that is <= 32 (amortizes the ~600-cycle per-grid-step
    overhead while keeping the unrolled in-kernel loop modest)."""
    tt = min(T, 32)
    while T % tt:
        tt -= 1
    return tt


def _default_batch_tile(B, TT, H):
    """Largest divisor of B whose [TT, tb, 4H] f32 gate block stays under ~8 MiB
    (keeps double-buffered blocks comfortably inside VMEM on every generation)."""
    budget = 8 * 1024 * 1024
    bytes_for = lambda tb: TT * tb * 4 * H * 4
    if bytes_for(B) <= budget:
        return B
    cands = [tb for tb in range(B, 0, -1) if B % tb == 0 and bytes_for(tb) <= budget]
    aligned = [tb for tb in cands if tb % 8 == 0]
    return (aligned or cands or [1])[0]


def _permute_gates_ifog(w, H):
    """PyTorch column order (i,f,g,o) -> kernel order (i,f,o,g) along the last axis."""
    return jnp.concatenate(
        [w[..., :2 * H], w[..., 3 * H:4 * H], w[..., 2 * H:3 * H]], axis=-1)


# ----------------------------------------------------------------- wrapper ---

def bilstm_layer(x_parts, layer_params, *, time_block=None, batch_tile=None,
                 compute_dtype=jnp.bfloat16):
    """One bidirectional LSTM layer.

    x_parts: list of [T, B, D_k] arrays whose feature concat is the layer input
             (1 part for the first layer, (fwd, bwd) afterwards -- avoids an explicit
             [T,B,2H] concat between layers).
    layer_params: (w_ih [2, D, 4H], w_hh [2, H, 4H], b [2, 4H]) in PyTorch gate order
                  (i,f,g,o); leading axis = (forward, backward).
    Returns (out_fwd [T,B,H], out_bwd [T,B,H]).
    """
    w_ih, w_hh, b = layer_params
    T, B = x_parts[0].shape[0], x_parts[0].shape[1]
    H = w_hh.shape[1]

    # one-time gate-column permutation (outside the recurrence)
    w_ih = _permute_gates_ifog(w_ih, H)
    w_hh = _permute_gates_ifog(w_hh, H)
    b = _permute_gates_ifog(b, H)

    # ---- hoisted input projection (one big MXU pass per layer, bias folded in) ----
    # gx[z] = sum_k x_parts[k] @ w_ih[z, rows_k] + b[z]   -> [2, T, B, 4H], f32
    gx = b[:, None, None, :].astype(jnp.float32)
    row = 0
    for part in x_parts:
        dk = part.shape[-1]
        gx = gx + jnp.einsum(
            "tbd,zdg->ztbg",
            part.astype(compute_dtype),
            w_ih[:, row:row + dk, :].astype(compute_dtype),
            preferred_element_type=jnp.float32)
        row += dk

    TT = _default_time_block(T) if time_block is None else time_block
    assert T % TT == 0, "time_block must divide the sequence length"
    Tb = T // TT
    tb = _default_batch_tile(B, TT, H) if batch_tile is None else batch_tile
    assert B % tb == 0, "batch_tile must divide the batch size"

    # forward direction (d=0) reads/writes time block ti; backward (d=1) block Tb-1-ti
    def io_index(d, bi, ti):
        return (d, ti * (1 - d) + (Tb - 1 - ti) * d, bi, 0)

    out = pl.pallas_call(
        _bilstm_rec_kernel,
        out_shape=jax.ShapeDtypeStruct((2, T, B, H), x_parts[0].dtype),
        grid_spec=pltpu.PrefetchScalarGridSpec(
            num_scalar_prefetch=0,
            grid=(2, B // tb, Tb),
            in_specs=[
                pl.BlockSpec((None, TT, tb, 4 * H), io_index),
                # W_hh resident per direction (bf16 and only one direction at a time,
                # so no need to single-buffer it explicitly)
                pl.BlockSpec((None, H, 4 * H), lambda d, bi, ti: (d, 0, 0)),
            ],
            out_specs=pl.BlockSpec((None, TT, tb, H), io_index),
            scratch_shapes=[
                pltpu.VMEM((tb, H), jnp.float32),   # h carry
                pltpu.VMEM((tb, H), jnp.float32),   # c carry
            ],
        ),
        compiler_params=pltpu.CompilerParams(
            # direction & batch tiles are independent recurrences -> shardable across
            # TensorCores (v7x megacore); the time axis carries h/c -> arbitrary.
            dimension_semantics=("parallel", "parallel", "arbitrary"),
            vmem_limit_bytes=_vmem_limit_bytes(),
        ),
    )(gx, w_hh.astype(compute_dtype))

    return out[0], out[1]


def stacked_brnn_forward(x, x_mask, layer_params, *, concat_layers=False,
                         dropout_rate=0.0, time_block=None, batch_tile=None,
                         compute_dtype=jnp.bfloat16):
    """x: [B, T, D], x_mask: [B, T] (1 = padding).  Unpadded path (mask is ignored)."""
    del x_mask, dropout_rate  # unpadded path; dropout p=0 -> identity
    h_parts = [jnp.transpose(x, (1, 0, 2))]        # [T, B, D]
    per_layer = []
    for params in layer_params:
        fwd, bwd = bilstm_layer(h_parts, params, time_block=time_block,
                                batch_tile=batch_tile, compute_dtype=compute_dtype)
        h_parts = [fwd, bwd]
        per_layer.append((fwd, bwd))
    if concat_layers:
        out = jnp.concatenate([d for fb in per_layer for d in fb], axis=-1)
    else:
        out = jnp.concatenate(per_layer[-1], axis=-1)
    return jnp.transpose(out, (1, 0, 2))           # [B, T, *]


# ------------------------------------------------------------------- init ----

def init_params(key, input_size, hidden_size, num_layers):
    """PyTorch-style LSTM init U(-1/sqrt(H), 1/sqrt(H)).  Per layer:
    w_ih [2, D_in, 4H], w_hh [2, H, 4H], b [2, 4H] (= b_ih + b_hh),
    gate order (i,f,g,o), leading axis = (forward, backward).
    Weights are stored transposed relative to PyTorch's [4H, D]."""
    layers = []
    bound = 1.0 / float(hidden_size) ** 0.5
    d_in = input_size
    for _ in range(num_layers):
        key, k0, k1, k2, k3 = jax.random.split(key, 5)
        u = lambda k, shape: jax.random.uniform(k, shape, jnp.float32, -bound, bound)
        w_ih = u(k0, (2, d_in, 4 * hidden_size))
        w_hh = u(k1, (2, hidden_size, 4 * hidden_size))
        b = u(k2, (2, 4 * hidden_size)) + u(k3, (2, 4 * hidden_size))
        layers.append((w_ih, w_hh, b))
        d_in = 2 * hidden_size
    return layers


# --------------------------------------------------------------- reference ---

def _lstm_ref_dir(x_tbd, w_ih, w_hh, b, compute_dtype):
    H = w_hh.shape[0]
    w_ih_c = w_ih.astype(compute_dtype)
    w_hh_c = w_hh.astype(compute_dtype)

    def step(carry, x_t):
        h, c = carry
        gates = (jnp.dot(x_t.astype(compute_dtype), w_ih_c,
                         preferred_element_type=jnp.float32)
                 + jnp.dot(h.astype(compute_dtype), w_hh_c,
                           preferred_element_type=jnp.float32)
                 + b)
        i = jax.nn.sigmoid(gates[:, 0 * H:1 * H])
        f = jax.nn.sigmoid(gates[:, 1 * H:2 * H])
        g = jnp.tanh(gates[:, 2 * H:3 * H])
        o = jax.nn.sigmoid(gates[:, 3 * H:4 * H])
        c = f * c + i * g
        h = o * jnp.tanh(c)
        return (h, c), h

    B = x_tbd.shape[1]
    init = (jnp.zeros((B, H), jnp.float32), jnp.zeros((B, H), jnp.float32))
    _, hs = lax.scan(step, init, x_tbd)
    return hs


def stacked_brnn_ref(x, layer_params, *, concat_layers=False,
                     compute_dtype=jnp.float32):
    h = jnp.transpose(x, (1, 0, 2)).astype(jnp.float32)
    outs = []
    for (w_ih, w_hh, b) in layer_params:
        fwd = _lstm_ref_dir(h, w_ih[0], w_hh[0], b[0], compute_dtype)
        bwd = _lstm_ref_dir(h[::-1], w_ih[1], w_hh[1], b[1], compute_dtype)[::-1]
        h = jnp.concatenate([fwd, bwd], axis=-1)
        outs.append(h)
    out = jnp.concatenate(outs, axis=-1) if concat_layers else outs[-1]
    return jnp.transpose(out, (1, 0, 2))


# -------------------------------------------------------------------- main ---

if __name__ == "__main__":
    key = jax.random.PRNGKey(0)
    kx, kp = jax.random.split(key)

    batch, seq = 2, 8
    input_size, hidden_size, num_layers = 32, 32, 2

    x = jax.random.normal(kx, (batch, seq, input_size), jnp.float32)
    x_mask = jnp.zeros((batch, seq), jnp.int32)   # no padding -> unpadded path
    params = init_params(kp, input_size, hidden_size, num_layers)

    # --- f32 compute path vs f32 reference (strict) ---------------------------
    out = stacked_brnn_forward(x, x_mask, params, concat_layers=False,
                               compute_dtype=jnp.float32)
    out = jax.block_until_ready(out)
    ref = stacked_brnn_ref(x, params, concat_layers=False,
                           compute_dtype=jnp.float32)
    assert out.shape == (batch, seq, 2 * hidden_size)
    err = float(jnp.max(jnp.abs(out - ref)))
    assert jnp.allclose(out, ref, atol=2e-3, rtol=2e-3), err

    # concat_layers=True variant
    out_c = stacked_brnn_forward(x, x_mask, params, concat_layers=True,
                                 compute_dtype=jnp.float32)
    out_c = jax.block_until_ready(out_c)
    ref_c = stacked_brnn_ref(x, params, concat_layers=True,
                             compute_dtype=jnp.float32)
    assert out_c.shape == (batch, seq, num_layers * 2 * hidden_size)
    assert jnp.allclose(out_c, ref_c, atol=2e-3, rtol=2e-3)

    # --- default bf16-MXU path vs precision-matched reference -----------------
    out_bf = stacked_brnn_forward(x, x_mask, params, concat_layers=False)
    out_bf = jax.block_until_ready(out_bf)
    ref_bf = stacked_brnn_ref(x, params, concat_layers=False,
                              compute_dtype=jnp.bfloat16)
    assert jnp.allclose(out_bf, ref_bf, atol=1e-2, rtol=1e-2)

    print("KERNEL_OK")
</pallas_src>

<mosaic_0001>
module attributes {stable_mosaic.version = 11 : i64} {
  func.func @_bilstm_rec_kernel(%arg0: i32, %arg1: i32, %arg2: i32, %arg3: memref<1x8x2x128xf32, #tpu.memory_space<vmem>>, %arg4: memref<1x32x128xf32, #tpu.memory_space<vmem>>, %arg5: memref<1x8x2x32xf32, #tpu.memory_space<vmem>>, %arg6: memref<2x32xf32, #tpu.memory_space<vmem>>, %arg7: memref<2x32xf32, #tpu.memory_space<vmem>>) attributes {dimension_semantics = [#tpu.dimension_semantics<parallel>, #tpu.dimension_semantics<parallel>, #tpu.dimension_semantics<arbitrary>], iteration_bounds = array<i64: 2, 1, 1>, scalar_prefetch = 0 : i64, scratch_operands = 2 : i64, tpu.core_type = #tpu.core_type<tc>, window_params = [{transform_indices = @transform_0, window_bounds = array<i64: 1, 8, 2, 128>}, {transform_indices = @transform_1, window_bounds = array<i64: 1, 32, 128>}, {transform_indices = @transform_2, window_bounds = array<i64: 1, 8, 2, 32>}]} {
    %c0_i32 = arith.constant 0 : i32
    %0 = arith.cmpi eq, %arg2, %c0_i32 : i32
    %1 = arith.extui %0 : i1 to i32
    %c0_i32_0 = arith.constant 0 : i32
    %2 = arith.cmpi ne, %1, %c0_i32_0 : i32
    scf.if %2 {
      %cst_91 = arith.constant 0.000000e+00 : f32
      %241 = vector.broadcast %cst_91 : f32 to vector<2x32xf32>
      %c0_92 = arith.constant 0 : index
      %c0_93 = arith.constant 0 : index
      %242 = vector.load %arg6[%c0_92, %c0_93] : memref<2x32xf32, #tpu.memory_space<vmem>>, vector<2x32xf32>
      tpu.vector_store %arg6[%c0_92, %c0_93], %241 {strides = array<i32>} : memref<2x32xf32, #tpu.memory_space<vmem>>, vector<2x32xf32>,
      %cst_94 = arith.constant 0.000000e+00 : f32
      %243 = vector.broadcast %cst_94 : f32 to vector<2x32xf32>
      %c0_95 = arith.constant 0 : index
      %c0_96 = arith.constant 0 : index
      %244 = vector.load %arg7[%c0_95, %c0_96] : memref<2x32xf32, #tpu.memory_space<vmem>>, vector<2x32xf32>
      tpu.vector_store %arg7[%c0_95, %c0_96], %243 {strides = array<i32>} : memref<2x32xf32, #tpu.memory_space<vmem>>, vector<2x32xf32>,
    } else {
    }
    %c0 = arith.constant 0 : index
    %c0_1 = arith.constant 0 : index
    %c0_2 = arith.constant 0 : index
    %3 = vector.load %arg4[%c0, %c0_1, %c0_2] : memref<1x32x128xf32, #tpu.memory_space<vmem>>, vector<1x32x128xf32>
    %4 = vector.shape_cast %3 : vector<1x32x128xf32> to vector<32x128xf32>
    %c0_3 = arith.constant 0 : index
    %c0_4 = arith.constant 0 : index
    %5 = vector.load %arg6[%c0_3, %c0_4] : memref<2x32xf32, #tpu.memory_space<vmem>>, vector<2x32xf32>
    %c0_5 = arith.constant 0 : index
    %c0_6 = arith.constant 0 : index
    %6 = vector.load %arg7[%c0_5, %c0_6] : memref<2x32xf32, #tpu.memory_space<vmem>>, vector<2x32xf32>
    %c0_i32_7 = arith.constant 0 : i32
    %c2_i32 = arith.constant 2 : i32
    %7 = arith.muli %c2_i32, %c0_i32_7 : i32
    %c7_i32 = arith.constant 7 : i32
    %8 = arith.subi %c7_i32, %7 : i32
    %9 = arith.muli %arg0, %8 : i32
    %10 = arith.addi %c0_i32_7, %9 : i32
    %c0_8 = arith.constant 0 : index
    %11 = arith.index_cast %10 : i32 to index
    %c0_9 = arith.constant 0 : index
    %c0_10 = arith.constant 0 : index
    %12 = vector.load %arg3[%c0_8, %11, %c0_9, %c0_10] : memref<1x8x2x128xf32, #tpu.memory_space<vmem>>, vector<1x1x2x128xf32>
    %13 = vector.shape_cast %12 : vector<1x1x2x128xf32> to vector<2x128xf32>
    %cst = arith.constant dense<0.000000e+00> : vector<2x128xf32>
    %14 = tpu.matmul %5, %4, %cst {dimension_numbers = #tpu.dot_dimension_numbers<[1], [0], [0], [1], [0, 0, 1, 1], [], []>} : vector<2x32xf32>, vector<32x128xf32>, vector<2x128xf32> -> vector<2x128xf32>
    %15 = arith.addf %13, %14 : vector<2x128xf32>
    %16 = vector.extract_strided_slice %15 {offsets = [0, 0], sizes = [2, 96], strides = [1, 1]} : vector<2x128xf32> to vector<2x96xf32>
    %17 = arith.negf %16 : vector<2x96xf32>
    %18 = math.exp %17 : vector<2x96xf32>
    %cst_11 = arith.constant 1.000000e+00 : f32
    %19 = vector.broadcast %cst_11 : f32 to vector<2x96xf32>
    %20 = arith.addf %19, %18 : vector<2x96xf32>
    %21 = arith.divf %19, %20 : vector<2x96xf32>
    %22 = vector.extract_strided_slice %15 {offsets = [0, 96], sizes = [2, 32], strides = [1, 1]} : vector<2x128xf32> to vector<2x32xf32>
    %23 = math.tanh %22 : vector<2x32xf32>
    %24 = vector.extract_strided_slice %21 {offsets = [0, 0], sizes = [2, 32], strides = [1, 1]} : vector<2x96xf32> to vector<2x32xf32>
    %25 = vector.extract_strided_slice %21 {offsets = [0, 32], sizes = [2, 32], strides = [1, 1]} : vector<2x96xf32> to vector<2x32xf32>
    %26 = vector.extract_strided_slice %21 {offsets = [0, 64], sizes = [2, 32], strides = [1, 1]} : vector<2x96xf32> to vector<2x32xf32>
    %27 = arith.mulf %25, %6 : vector<2x32xf32>
    %28 = arith.mulf %24, %23 : vector<2x32xf32>
    %29 = arith.addf %27, %28 : vector<2x32xf32>
    %30 = math.tanh %29 : vector<2x32xf32>
    %31 = arith.mulf %26, %30 : vector<2x32xf32>
    %c0_12 = arith.constant 0 : index
    %32 = arith.index_cast %10 : i32 to index
    %c0_13 = arith.constant 0 : index
    %c0_14 = arith.constant 0 : index
    %33 = vector.load %arg5[%c0_12, %32, %c0_13, %c0_14] : memref<1x8x2x32xf32, #tpu.memory_space<vmem>>, vector<1x1x2x32xf32>
    %34 = vector.shape_cast %33 : vector<1x1x2x32xf32> to vector<2x32xf32>
    %35 = vector.shape_cast %31 : vector<2x32xf32> to vector<1x1x2x32xf32>
    tpu.vector_store %arg5[%c0_12, %32, %c0_13, %c0_14], %35 {strides = array<i32>} : memref<1x8x2x32xf32, #tpu.memory_space<vmem>>, vector<1x1x2x32xf32>,
    %c1_i32 = arith.constant 1 : i32
    %c2_i32_15 = arith.constant 2 : i32
    %36 = arith.muli %c2_i32_15, %c1_i32 : i32
    %c7_i32_16 = arith.constant 7 : i32
    %37 = arith.subi %c7_i32_16, %36 : i32
    %38 = arith.muli %arg0, %37 : i32
    %39 = arith.addi %c1_i32, %38 : i32
    %c0_17 = arith.constant 0 : index
    %40 = arith.index_cast %39 : i32 to index
    %c0_18 = arith.constant 0 : index
    %c0_19 = arith.constant 0 : index
    %41 = vector.load %arg3[%c0_17, %40, %c0_18, %c0_19] : memref<1x8x2x128xf32, #tpu.memory_space<vmem>>, vector<1x1x2x128xf32>
    %42 = vector.shape_cast %41 : vector<1x1x2x128xf32> to vector<2x128xf32>
    %cst_20 = arith.constant dense<0.000000e+00> : vector<2x128xf32>
    %43 = tpu.matmul %31, %4, %cst_20 {dimension_numbers = #tpu.dot_dimension_numbers<[1], [0], [0], [1], [0, 0, 1, 1], [], []>} : vector<2x32xf32>, vector<32x128xf32>, vector<2x128xf32> -> vector<2x128xf32>
    %44 = arith.addf %42, %43 : vector<2x128xf32>
    %45 = vector.extract_strided_slice %44 {offsets = [0, 0], sizes = [2, 96], strides = [1, 1]} : vector<2x128xf32> to vector<2x96xf32>
    %46 = arith.negf %45 : vector<2x96xf32>
    %47 = math.exp %46 : vector<2x96xf32>
    %cst_21 = arith.constant 1.000000e+00 : f32
    %48 = vector.broadcast %cst_21 : f32 to vector<2x96xf32>
    %49 = arith.addf %48, %47 : vector<2x96xf32>
    %50 = arith.divf %48, %49 : vector<2x96xf32>
    %51 = vector.extract_strided_slice %44 {offsets = [0, 96], sizes = [2, 32], strides = [1, 1]} : vector<2x128xf32> to vector<2x32xf32>
    %52 = math.tanh %51 : vector<2x32xf32>
    %53 = vector.extract_strided_slice %50 {offsets = [0, 0], sizes = [2, 32], strides = [1, 1]} : vector<2x96xf32> to vector<2x32xf32>
    %54 = vector.extract_strided_slice %50 {offsets = [0, 32], sizes = [2, 32], strides = [1, 1]} : vector<2x96xf32> to vector<2x32xf32>
    %55 = vector.extract_strided_slice %50 {offsets = [0, 64], sizes = [2, 32], strides = [1, 1]} : vector<2x96xf32> to vector<2x32xf32>
    %56 = arith.mulf %54, %29 : vector<2x32xf32>
    %57 = arith.mulf %53, %52 : vector<2x32xf32>
    %58 = arith.addf %56, %57 : vector<2x32xf32>
    %59 = math.tanh %58 : vector<2x32xf32>
    %60 = arith.mulf %55, %59 : vector<2x32xf32>
    %c0_22 = arith.constant 0 : index
    %61 = arith.index_cast %39 : i32 to index
    %c0_23 = arith.constant 0 : index
    %c0_24 = arith.constant 0 : index
    %62 = vector.load %arg5[%c0_22, %61, %c0_23, %c0_24] : memref<1x8x2x32xf32, #tpu.memory_space<vmem>>, vector<1x1x2x32xf32>
    %63 = vector.shape_cast %62 : vector<1x1x2x32xf32> to vector<2x32xf32>
    %64 = vector.shape_cast %60 : vector<2x32xf32> to vector<1x1x2x32xf32>
    tpu.vector_store %arg5[%c0_22, %61, %c0_23, %c0_24], %64 {strides = array<i32>} : memref<1x8x2x32xf32, #tpu.memory_space<vmem>>, vector<1x1x2x32xf32>,
    %c2_i32_25 = arith.constant 2 : i32
    %c2_i32_26 = arith.constant 2 : i32
    %65 = arith.muli %c2_i32_26, %c2_i32_25 : i32
    %c7_i32_27 = arith.constant 7 : i32
    %66 = arith.subi %c7_i32_27, %65 : i32
    %67 = arith.muli %arg0, %66 : i32
    %68 = arith.addi %c2_i32_25, %67 : i32
    %c0_28 = arith.constant 0 : index
    %69 = arith.index_cast %68 : i32 to index
    %c0_29 = arith.constant 0 : index
    %c0_30 = arith.constant 0 : index
    %70 = vector.load %arg3[%c0_28, %69, %c0_29, %c0_30] : memref<1x8x2x128xf32, #tpu.memory_space<vmem>>, vector<1x1x2x128xf32>
    %71 = vector.shape_cast %70 : vector<1x1x2x128xf32> to vector<2x128xf32>
    %cst_31 = arith.constant dense<0.000000e+00> : vector<2x128xf32>
    %72 = tpu.matmul %60, %4, %cst_31 {dimension_numbers = #tpu.dot_dimension_numbers<[1], [0], [0], [1], [0, 0, 1, 1], [], []>} : vector<2x32xf32>, vector<32x128xf32>, vector<2x128xf32> -> vector<2x128xf32>
    %73 = arith.addf %71, %72 : vector<2x128xf32>
    %74 = vector.extract_strided_slice %73 {offsets = [0, 0], sizes = [2, 96], strides = [1, 1]} : vector<2x128xf32> to vector<2x96xf32>
    %75 = arith.negf %74 : vector<2x96xf32>
    %76 = math.exp %75 : vector<2x96xf32>
    %cst_32 = arith.constant 1.000000e+00 : f32
    %77 = vector.broadcast %cst_32 : f32 to vector<2x96xf32>
    %78 = arith.addf %77, %76 : vector<2x96xf32>
    %79 = arith.divf %77, %78 : vector<2x96xf32>
    %80 = vector.extract_strided_slice %73 {offsets = [0, 96], sizes = [2, 32], strides = [1, 1]} : vector<2x128xf32> to vector<2x32xf32>
    %81 = math.tanh %80 : vector<2x32xf32>
    %82 = vector.extract_strided_slice %79 {offsets = [0, 0], sizes = [2, 32], strides = [1, 1]} : vector<2x96xf32> to vector<2x32xf32>
    %83 = vector.extract_strided_slice %79 {offsets = [0, 32], sizes = [2, 32], strides = [1, 1]} : vector<2x96xf32> to vector<2x32xf32>
    %84 = vector.extract_strided_slice %79 {offsets = [0, 64], sizes = [2, 32], strides = [1, 1]} : vector<2x96xf32> to vector<2x32xf32>
    %85 = arith.mulf %83, %58 : vector<2x32xf32>
    %86 = arith.mulf %82, %81 : vector<2x32xf32>
    %87 = arith.addf %85, %86 : vector<2x32xf32>
    %88 = math.tanh %87 : vector<2x32xf32>
    %89 = arith.mulf %84, %88 : vector<2x32xf32>
    %c0_33 = arith.constant 0 : index
    %90 = arith.index_cast %68 : i32 to index
    %c0_34 = arith.constant 0 : index
    %c0_35 = arith.constant 0 : index
    %91 = vector.load %arg5[%c0_33, %90, %c0_34, %c0_35] : memref<1x8x2x32xf32, #tpu.memory_space<vmem>>, vector<1x1x2x32xf32>
    %92 = vector.shape_cast %91 : vector<1x1x2x32xf32> to vector<2x32xf32>
    %93 = vector.shape_cast %89 : vector<2x32xf32> to vector<1x1x2x32xf32>
    tpu.vector_store %arg5[%c0_33, %90, %c0_34, %c0_35], %93 {strides = array<i32>} : memref<1x8x2x32xf32, #tpu.memory_space<vmem>>, vector<1x1x2x32xf32>,
    %c3_i32 = arith.constant 3 : i32
    %c2_i32_36 = arith.constant 2 : i32
    %94 = arith.muli %c2_i32_36, %c3_i32 : i32
    %c7_i32_37 = arith.constant 7 : i32
    %95 = arith.subi %c7_i32_37, %94 : i32
    %96 = arith.muli %arg0, %95 : i32
    %97 = arith.addi %c3_i32, %96 : i32
    %c0_38 = arith.constant 0 : index
    %98 = arith.index_cast %97 : i32 to index
    %c0_39 = arith.constant 0 : index
    %c0_40 = arith.constant 0 : index
    %99 = vector.load %arg3[%c0_38, %98, %c0_39, %c0_40] : memref<1x8x2x128xf32, #tpu.memory_space<vmem>>, vector<1x1x2x128xf32>
    %100 = vector.shape_cast %99 : vector<1x1x2x128xf32> to vector<2x128xf32>
    %cst_41 = arith.constant dense<0.000000e+00> : vector<2x128xf32>
    %101 = tpu.matmul %89, %4, %cst_41 {dimension_numbers = #tpu.dot_dimension_numbers<[1], [0], [0], [1], [0, 0, 1, 1], [], []>} : vector<2x32xf32>, vector<32x128xf32>, vector<2x128xf32> -> vector<2x128xf32>
    %102 = arith.addf %100, %101 : vector<2x128xf32>
    %103 = vector.extract_strided_slice %102 {offsets = [0, 0], sizes = [2, 96], strides = [1, 1]} : vector<2x128xf32> to vector<2x96xf32>
    %104 = arith.negf %103 : vector<2x96xf32>
    %105 = math.exp %104 : vector<2x96xf32>
    %cst_42 = arith.constant 1.000000e+00 : f32
    %106 = vector.broadcast %cst_42 : f32 to vector<2x96xf32>
    %107 = arith.addf %106, %105 : vector<2x96xf32>
    %108 = arith.divf %106, %107 : vector<2x96xf32>
    %109 = vector.extract_strided_slice %102 {offsets = [0, 96], sizes = [2, 32], strides = [1, 1]} : vector<2x128xf32> to vector<2x32xf32>
    %110 = math.tanh %109 : vector<2x32xf32>
    %111 = vector.extract_strided_slice %108 {offsets = [0, 0], sizes = [2, 32], strides = [1, 1]} : vector<2x96xf32> to vector<2x32xf32>
    %112 = vector.extract_strided_slice %108 {offsets = [0, 32], sizes = [2, 32], strides = [1, 1]} : vector<2x96xf32> to vector<2x32xf32>
    %113 = vector.extract_strided_slice %108 {offsets = [0, 64], sizes = [2, 32], strides = [1, 1]} : vector<2x96xf32> to vector<2x32xf32>
    %114 = arith.mulf %112, %87 : vector<2x32xf32>
    %115 = arith.mulf %111, %110 : vector<2x32xf32>
    %116 = arith.addf %114, %115 : vector<2x32xf32>
    %117 = math.tanh %116 : vector<2x32xf32>
    %118 = arith.mulf %113, %117 : vector<2x32xf32>
    %c0_43 = arith.constant 0 : index
    %119 = arith.index_cast %97 : i32 to index
    %c0_44 = arith.constant 0 : index
    %c0_45 = arith.constant 0 : index
    %120 = vector.load %arg5[%c0_43, %119, %c0_44, %c0_45] : memref<1x8x2x32xf32, #tpu.memory_space<vmem>>, vector<1x1x2x32xf32>
    %121 = vector.shape_cast %120 : vector<1x1x2x32xf32> to vector<2x32xf32>
    %122 = vector.shape_cast %118 : vector<2x32xf32> to vector<1x1x2x32xf32>
    tpu.vector_store %arg5[%c0_43, %119, %c0_44, %c0_45], %122 {strides = array<i32>} : memref<1x8x2x32xf32, #tpu.memory_space<vmem>>, vector<1x1x2x32xf32>,
    %c4_i32 = arith.constant 4 : i32
    %c2_i32_46 = arith.constant 2 : i32
    %123 = arith.muli %c2_i32_46, %c4_i32 : i32
    %c7_i32_47 = arith.constant 7 : i32
    %124 = arith.subi %c7_i32_47, %123 : i32
    %125 = arith.muli %arg0, %124 : i32
    %126 = arith.addi %c4_i32, %125 : i32
    %c0_48 = arith.constant 0 : index
    %127 = arith.index_cast %126 : i32 to index
    %c0_49 = arith.constant 0 : index
    %c0_50 = arith.constant 0 : index
    %128 = vector.load %arg3[%c0_48, %127, %c0_49, %c0_50] : memref<1x8x2x128xf32, #tpu.memory_space<vmem>>, vector<1x1x2x128xf32>
    %129 = vector.shape_cast %128 : vector<1x1x2x128xf32> to vector<2x128xf32>
    %cst_51 = arith.constant dense<0.000000e+00> : vector<2x128xf32>
    %130 = tpu.matmul %118, %4, %cst_51 {dimension_numbers = #tpu.dot_dimension_numbers<[1], [0], [0], [1], [0, 0, 1, 1], [], []>} : vector<2x32xf32>, vector<32x128xf32>, vector<2x128xf32> -> vector<2x128xf32>
    %131 = arith.addf %129, %130 : vector<2x128xf32>
    %132 = vector.extract_strided_slice %131 {offsets = [0, 0], sizes = [2, 96], strides = [1, 1]} : vector<2x128xf32> to vector<2x96xf32>
    %133 = arith.negf %132 : vector<2x96xf32>
    %134 = math.exp %133 : vector<2x96xf32>
    %cst_52 = arith.constant 1.000000e+00 : f32
    %135 = vector.broadcast %cst_52 : f32 to vector<2x96xf32>
    %136 = arith.addf %135, %134 : vector<2x96xf32>
    %137 = arith.divf %135, %136 : vector<2x96xf32>
    %138 = vector.extract_strided_slice %131 {offsets = [0, 96], sizes = [2, 32], strides = [1, 1]} : vector<2x128xf32> to vector<2x32xf32>
    %139 = math.tanh %138 : vector<2x32xf32>
    %140 = vector.extract_strided_slice %137 {offsets = [0, 0], sizes = [2, 32], strides = [1, 1]} : vector<2x96xf32> to vector<2x32xf32>
    %141 = vector.extract_strided_slice %137 {offsets = [0, 32], sizes = [2, 32], strides = [1, 1]} : vector<2x96xf32> to vector<2x32xf32>
    %142 = vector.extract_strided_slice %137 {offsets = [0, 64], sizes = [2, 32], strides = [1, 1]} : vector<2x96xf32> to vector<2x32xf32>
    %143 = arith.mulf %141, %116 : vector<2x32xf32>
    %144 = arith.mulf %140, %139 : vector<2x32xf32>
    %145 = arith.addf %143, %144 : vector<2x32xf32>
    %146 = math.tanh %145 : vector<2x32xf32>
    %147 = arith.mulf %142, %146 : vector<2x32xf32>
    %c0_53 = arith.constant 0 : index
    %148 = arith.index_cast %126 : i32 to index
    %c0_54 = arith.constant 0 : index
    %c0_55 = arith.constant 0 : index
    %149 = vector.load %arg5[%c0_53, %148, %c0_54, %c0_55] : memref<1x8x2x32xf32, #tpu.memory_space<vmem>>, vector<1x1x2x32xf32>
    %150 = vector.shape_cast %149 : vector<1x1x2x32xf32> to vector<2x32xf32>
    %151 = vector.shape_cast %147 : vector<2x32xf32> to vector<1x1x2x32xf32>
    tpu.vector_store %arg5[%c0_53, %148, %c0_54, %c0_55], %151 {strides = array<i32>} : memref<1x8x2x32xf32, #tpu.memory_space<vmem>>, vector<1x1x2x32xf32>,
    %c5_i32 = arith.constant 5 : i32
    %c2_i32_56 = arith.constant 2 : i32
    %152 = arith.muli %c2_i32_56, %c5_i32 : i32
    %c7_i32_57 = arith.constant 7 : i32
    %153 = arith.subi %c7_i32_57, %152 : i32
    %154 = arith.muli %arg0, %153 : i32
    %155 = arith.addi %c5_i32, %154 : i32
    %c0_58 = arith.constant 0 : index
    %156 = arith.index_cast %155 : i32 to index
    %c0_59 = arith.constant 0 : index
    %c0_60 = arith.constant 0 : index
    %157 = vector.load %arg3[%c0_58, %156, %c0_59, %c0_60] : memref<1x8x2x128xf32, #tpu.memory_space<vmem>>, vector<1x1x2x128xf32>
    %158 = vector.shape_cast %157 : vector<1x1x2x128xf32> to vector<2x128xf32>
    %cst_61 = arith.constant dense<0.000000e+00> : vector<2x128xf32>
    %159 = tpu.matmul %147, %4, %cst_61 {dimension_numbers = #tpu.dot_dimension_numbers<[1], [0], [0], [1], [0, 0, 1, 1], [], []>} : vector<2x32xf32>, vector<32x128xf32>, vector<2x128xf32> -> vector<2x128xf32>
    %160 = arith.addf %158, %159 : vector<2x128xf32>
    %161 = vector.extract_strided_slice %160 {offsets = [0, 0], sizes = [2, 96], strides = [1, 1]} : vector<2x128xf32> to vector<2x96xf32>
    %162 = arith.negf %161 : vector<2x96xf32>
    %163 = math.exp %162 : vector<2x96xf32>
    %cst_62 = arith.constant 1.000000e+00 : f32
    %164 = vector.broadcast %cst_62 : f32 to vector<2x96xf32>
    %165 = arith.addf %164, %163 : vector<2x96xf32>
    %166 = arith.divf %164, %165 : vector<2x96xf32>
    %167 = vector.extract_strided_slice %160 {offsets = [0, 96], sizes = [2, 32], strides = [1, 1]} : vector<2x128xf32> to vector<2x32xf32>
    %168 = math.tanh %167 : vector<2x32xf32>
    %169 = vector.extract_strided_slice %166 {offsets = [0, 0], sizes = [2, 32], strides = [1, 1]} : vector<2x96xf32> to vector<2x32xf32>
    %170 = vector.extract_strided_slice %166 {offsets = [0, 32], sizes = [2, 32], strides = [1, 1]} : vector<2x96xf32> to vector<2x32xf32>
    %171 = vector.extract_strided_slice %166 {offsets = [0, 64], sizes = [2, 32], strides = [1, 1]} : vector<2x96xf32> to vector<2x32xf32>
    %172 = arith.mulf %170, %145 : vector<2x32xf32>
    %173 = arith.mulf %169, %168 : vector<2x32xf32>
    %174 = arith.addf %172, %173 : vector<2x32xf32>
    %175 = math.tanh %174 : vector<2x32xf32>
    %176 = arith.mulf %171, %175 : vector<2x32xf32>
    %c0_63 = arith.constant 0 : index
    %177 = arith.index_cast %155 : i32 to index
    %c0_64 = arith.constant 0 : index
    %c0_65 = arith.constant 0 : index
    %178 = vector.load %arg5[%c0_63, %177, %c0_64, %c0_65] : memref<1x8x2x32xf32, #tpu.memory_space<vmem>>, vector<1x1x2x32xf32>
    %179 = vector.shape_cast %178 : vector<1x1x2x32xf32> to vector<2x32xf32>
    %180 = vector.shape_cast %176 : vector<2x32xf32> to vector<1x1x2x32xf32>
    tpu.vector_store %arg5[%c0_63, %177, %c0_64, %c0_65], %180 {strides = array<i32>} : memref<1x8x2x32xf32, #tpu.memory_space<vmem>>, vector<1x1x2x32xf32>,
    %c6_i32 = arith.constant 6 : i32
    %c2_i32_66 = arith.constant 2 : i32
    %181 = arith.muli %c2_i32_66, %c6_i32 : i32
    %c7_i32_67 = arith.constant 7 : i32
    %182 = arith.subi %c7_i32_67, %181 : i32
    %183 = arith.muli %arg0, %182 : i32
    %184 = arith.addi %c6_i32, %183 : i32
    %c0_68 = arith.constant 0 : index
    %185 = arith.index_cast %184 : i32 to index
    %c0_69 = arith.constant 0 : index
    %c0_70 = arith.constant 0 : index
    %186 = vector.load %arg3[%c0_68, %185, %c0_69, %c0_70] : memref<1x8x2x128xf32, #tpu.memory_space<vmem>>, vector<1x1x2x128xf32>
    %187 = vector.shape_cast %186 : vector<1x1x2x128xf32> to vector<2x128xf32>
    %cst_71 = arith.constant dense<0.000000e+00> : vector<2x128xf32>
    %188 = tpu.matmul %176, %4, %cst_71 {dimension_numbers = #tpu.dot_dimension_numbers<[1], [0], [0], [1], [0, 0, 1, 1], [], []>} : vector<2x32xf32>, vector<32x128xf32>, vector<2x128xf32> -> vector<2x128xf32>
    %189 = arith.addf %187, %188 : vector<2x128xf32>
    %190 = vector.extract_strided_slice %189 {offsets = [0, 0], sizes = [2, 96], strides = [1, 1]} : vector<2x128xf32> to vector<2x96xf32>
    %191 = arith.negf %190 : vector<2x96xf32>
    %192 = math.exp %191 : vector<2x96xf32>
    %cst_72 = arith.constant 1.000000e+00 : f32
    %193 = vector.broadcast %cst_72 : f32 to vector<2x96xf32>
    %194 = arith.addf %193, %192 : vector<2x96xf32>
    %195 = arith.divf %193, %194 : vector<2x96xf32>
    %196 = vector.extract_strided_slice %189 {offsets = [0, 96], sizes = [2, 32], strides = [1, 1]} : vector<2x128xf32> to vector<2x32xf32>
    %197 = math.tanh %196 : vector<2x32xf32>
    %198 = vector.extract_strided_slice %195 {offsets = [0, 0], sizes = [2, 32], strides = [1, 1]} : vector<2x96xf32> to vector<2x32xf32>
    %199 = vector.extract_strided_slice %195 {offsets = [0, 32], sizes = [2, 32], strides = [1, 1]} : vector<2x96xf32> to vector<2x32xf32>
    %200 = vector.extract_strided_slice %195 {offsets = [0, 64], sizes = [2, 32], strides = [1, 1]} : vector<2x96xf32> to vector<2x32xf32>
    %201 = arith.mulf %199, %174 : vector<2x32xf32>
    %202 = arith.mulf %198, %197 : vector<2x32xf32>
    %203 = arith.addf %201, %202 : vector<2x32xf32>
    %204 = math.tanh %203 : vector<2x32xf32>
    %205 = arith.mulf %200, %204 : vector<2x32xf32>
    %c0_73 = arith.constant 0 : index
    %206 = arith.index_cast %184 : i32 to index
    %c0_74 = arith.constant 0 : index
    %c0_75 = arith.constant 0 : index
    %207 = vector.load %arg5[%c0_73, %206, %c0_74, %c0_75] : memref<1x8x2x32xf32, #tpu.memory_space<vmem>>, vector<1x1x2x32xf32>
    %208 = vector.shape_cast %207 : vector<1x1x2x32xf32> to vector<2x32xf32>
    %209 = vector.shape_cast %205 : vector<2x32xf32> to vector<1x1x2x32xf32>
    tpu.vector_store %arg5[%c0_73, %206, %c0_74, %c0_75], %209 {strides = array<i32>} : memref<1x8x2x32xf32, #tpu.memory_space<vmem>>, vector<1x1x2x32xf32>,
    %c7_i32_76 = arith.constant 7 : i32
    %c2_i32_77 = arith.constant 2 : i32
    %210 = arith.muli %c2_i32_77, %c7_i32_76 : i32
    %c7_i32_78 = arith.constant 7 : i32
    %211 = arith.subi %c7_i32_78, %210 : i32
    %212 = arith.muli %arg0, %211 : i32
    %213 = arith.addi %c7_i32_76, %212 : i32
    %c0_79 = arith.constant 0 : index
    %214 = arith.index_cast %213 : i32 to index
    %c0_80 = arith.constant 0 : index
    %c0_81 = arith.constant 0 : index
    %215 = vector.load %arg3[%c0_79, %214, %c0_80, %c0_81] : memref<1x8x2x128xf32, #tpu.memory_space<vmem>>, vector<1x1x2x128xf32>
    %216 = vector.shape_cast %215 : vector<1x1x2x128xf32> to vector<2x128xf32>
    %cst_82 = arith.constant dense<0.000000e+00> : vector<2x128xf32>
    %217 = tpu.matmul %205, %4, %cst_82 {dimension_numbers = #tpu.dot_dimension_numbers<[1], [0], [0], [1], [0, 0, 1, 1], [], []>} : vector<2x32xf32>, vector<32x128xf32>, vector<2x128xf32> -> vector<2x128xf32>
    %218 = arith.addf %216, %217 : vector<2x128xf32>
    %219 = vector.extract_strided_slice %218 {offsets = [0, 0], sizes = [2, 96], strides = [1, 1]} : vector<2x128xf32> to vector<2x96xf32>
    %220 = arith.negf %219 : vector<2x96xf32>
    %221 = math.exp %220 : vector<2x96xf32>
    %cst_83 = arith.constant 1.000000e+00 : f32
    %222 = vector.broadcast %cst_83 : f32 to vector<2x96xf32>
    %223 = arith.addf %222, %221 : vector<2x96xf32>
    %224 = arith.divf %222, %223 : vector<2x96xf32>
    %225 = vector.extract_strided_slice %218 {offsets = [0, 96], sizes = [2, 32], strides = [1, 1]} : vector<2x128xf32> to vector<2x32xf32>
    %226 = math.tanh %225 : vector<2x32xf32>
    %227 = vector.extract_strided_slice %224 {offsets = [0, 0], sizes = [2, 32], strides = [1, 1]} : vector<2x96xf32> to vector<2x32xf32>
    %228 = vector.extract_strided_slice %224 {offsets = [0, 32], sizes = [2, 32], strides = [1, 1]} : vector<2x96xf32> to vector<2x32xf32>
    %229 = vector.extract_strided_slice %224 {offsets = [0, 64], sizes = [2, 32], strides = [1, 1]} : vector<2x96xf32> to vector<2x32xf32>
    %230 = arith.mulf %228, %203 : vector<2x32xf32>
    %231 = arith.mulf %227, %226 : vector<2x32xf32>
    %232 = arith.addf %230, %231 : vector<2x32xf32>
    %233 = math.tanh %232 : vector<2x32xf32>
    %234 = arith.mulf %229, %233 : vector<2x32xf32>
    %c0_84 = arith.constant 0 : index
    %235 = arith.index_cast %213 : i32 to index
    %c0_85 = arith.constant 0 : index
    %c0_86 = arith.constant 0 : index
    %236 = vector.load %arg5[%c0_84, %235, %c0_85, %c0_86] : memref<1x8x2x32xf32, #tpu.memory_space<vmem>>, vector<1x1x2x32xf32>
    %237 = vector.shape_cast %236 : vector<1x1x2x32xf32> to vector<2x32xf32>
    %238 = vector.shape_cast %234 : vector<2x32xf32> to vector<1x1x2x32xf32>
    tpu.vector_store %arg5[%c0_84, %235, %c0_85, %c0_86], %238 {strides = array<i32>} : memref<1x8x2x32xf32, #tpu.memory_space<vmem>>, vector<1x1x2x32xf32>,
    %c8_i32 = arith.constant 8 : i32
    %c0_87 = arith.constant 0 : index
    %c0_88 = arith.constant 0 : index
    %239 = vector.load %arg6[%c0_87, %c0_88] : memref<2x32xf32, #tpu.memory_space<vmem>>, vector<2x32xf32>
    tpu.vector_store %arg6[%c0_87, %c0_88], %234 {strides = array<i32>} : memref<2x32xf32, #tpu.memory_space<vmem>>, vector<2x32xf32>,
    %c0_89 = arith.constant 0 : index
    %c0_90 = arith.constant 0 : index
    %240 = vector.load %arg7[%c0_89, %c0_90] : memref<2x32xf32, #tpu.memory_space<vmem>>, vector<2x32xf32>
    tpu.vector_store %arg7[%c0_89, %c0_90], %232 {strides = array<i32>} : memref<2x32xf32, #tpu.memory_space<vmem>>, vector<2x32xf32>,
    return
  }
  func.func @transform_0(%arg0: i32, %arg1: i32, %arg2: i32) -> (i32, i32, i32, i32) {
    %c1_i32 = arith.constant 1 : i32
    %0 = arith.subi %c1_i32, %arg0 : i32
    %1 = arith.muli %arg2, %0 : i32
    %c0_i32 = arith.constant 0 : i32
    %2 = arith.subi %c0_i32, %arg2 : i32
    %3 = arith.muli %2, %arg0 : i32
    %4 = arith.addi %1, %3 : i32
    %c0_i32_0 = arith.constant 0 : i32
    %c0_i32_1 = arith.constant 0 : i32
    return %arg0, %4, %arg1, %c0_i32_0 : i32, i32, i32, i32
  }
  func.func @transform_1(%arg0: i32, %arg1: i32, %arg2: i32) -> (i32, i32, i32) {
    %c0_i32 = arith.constant 0 : i32
    %c0_i32_0 = arith.constant 0 : i32
    %c0_i32_1 = arith.constant 0 : i32
    return %arg0, %c0_i32, %c0_i32_0 : i32, i32, i32
  }
  func.func @transform_2(%arg0: i32, %arg1: i32, %arg2: i32) -> (i32, i32, i32, i32) {
    %c1_i32 = arith.constant 1 : i32
    %0 = arith.subi %c1_i32, %arg0 : i32
    %1 = arith.muli %arg2, %0 : i32
    %c0_i32 = arith.constant 0 : i32
    %2 = arith.subi %c0_i32, %arg2 : i32
    %3 = arith.muli %2, %arg0 : i32
    %4 = arith.addi %1, %3 : i32
    %c0_i32_0 = arith.constant 0 : i32
    %c0_i32_1 = arith.constant 0 : i32
    return %arg0, %4, %arg1, %c0_i32_0 : i32, i32, i32, i32
  }
}

</mosaic_0001>

<llo_original>
// kernel: tpu_custom_call.1
$region0: #{tpu_custom_call.1}
  #allocation0 [shape = 'u32[]', space=smem, size = 0x4, offset = 0x4, fixed_abs, tag = 'smem constant byte address 0x4 - core index']
  #allocation1 [shape = 'u32[144,128]{1,0:T(1,128)}', space=vmem, size = 0x12000, scoped, tag = 'internal scratch']
  #allocation2 [shape = 'f32[2,32]{1,0:T(2,128)}', space=vmem, size = 0x400, scoped, tag = 'scratch operand']
  #allocation3 [shape = 'f32[2,32]{1,0:T(2,128)}', space=vmem, size = 0x400, scoped, tag = 'scratch operand']
  %s0 = inlined_call_operand.hbm [shape: f32[2,8,2,128], index: 0, kind: input, shape index: {}]
  %s1 = inlined_call_operand.hbm [shape: f32[2,32,128], index: 1, kind: input, shape index: {}]
  %s2 = inlined_call_operand.hbm [shape: f32[2,8,2,32], index: 2, kind: output, shape index: {}]
  %s3 = sld [smem:[#allocation0]]
  $region53: #{tpu_custom_call.1} parent=0
    _
  %s5 = ssub.s32 1, %s3
  %s6 = scalar_select 0, %s5, %s3
  $region1: #{tpu_custom_call.1} parent=0
    #allocation4 [shape = 'u8[16384]{0}', space=vmem, size = 0x4000, scoped, tag = 'input window, operand 0']
    #allocation5 [shape = 's32[2]{0}', space=sflag, size = 0x8, scoped, tag = 'scoped memory for tpu_custom_call.1']
    #allocation6 [shape = 's32[2]{0}', space=sflag, size = 0x8, scoped, tag = 'scoped memory for tpu_custom_call.1']
    #allocation7 [shape = 'u8[32768]{0}', space=vmem, size = 0x8000, scoped, tag = 'input window, operand 1']
    #allocation8 [shape = 's32[2]{0}', space=sflag, size = 0x8, scoped, tag = 'scoped memory for tpu_custom_call.1']
    #allocation9 [shape = 'u8[16384]{0}', space=vmem, size = 0x4000, scoped, tag = 'output window, operand 0']
    %7 = vsyncpa [#allocation5], 0
    %s8 = scalar_lea.sflag [#allocation5], 1
    %9 = vsyncpa %s8, 0
    %10 = vsyncpa [#allocation8], 0
    %s11 = scalar_lea.sflag [#allocation8], 1
    %12 = vsyncpa %s11, 0
    %13 = vsyncpa [#allocation6], 0
    %s14 = scalar_lea.sflag [#allocation6], 1
    %15 = vsyncpa %s14, 0
    loop: start=0, step=1, limit=4
    $region2: #{tpu_custom_call.1} parent=1 // loop_pre_header
      _
    $region3: #{tpu_custom_call.1} parent=1 // loop_header
      %s17 = sphi 0, %s21
      %p18 = scmp.ge.s32.totalorder %s17, 4
      %s24 = sphi 0, %s43
      %s25 = sphi 0, %s39
      %s26 = sphi 0, %s35
      %s27 = sphi 0, %s24
      %s28 = sphi 0, %s25
      %s29 = sphi 0, %s26
      %s30 = sphi 0, %s27
      %s31 = sphi 0, %s28
      %s32 = sphi 0, %s29
      %s60 = sphi 0, %s62
      %s63 = sphi 0, %s60
      %s64 = sphi 0, %s63
      %s80 = sphi 0, %s64
      %s86 = sphi 0, %s88
      %s89 = sphi 0, %s86
      %s90 = sphi 0, %s89
      %s106 = sphi 0, %s90
      %s126 = sphi 0, %s128
      %s129 = sphi 0, %s126
      %s130 = sphi 0, %s129
      %s146 = sphi 0, %s130
    $region4: #{tpu_custom_call.1} parent=1 // loop_header_branch
      %20 = sbr.rel (%p18) target = $region8
    $region5: #{tpu_custom_call.1} parent=1 // loop_body
      %s22 = ssub.s32 %s17, 1
      %s23 = ssub.s32 %s17, 2
      %s33 = sadd.s32 1, %s26
      %p34 = scmp.ge.s32.totalorder %s33, 1
      %s35 = scalar_select %p34, 0, %s33
      %s36 = sadd.s32 1, %s25
      %s37 = scalar_select %p34, %s36, %s25
      %p38 = scmp.ge.s32.totalorder %s37, 1
      %s39 = scalar_select %p38, 0, %s37
      %s40 = sadd.s32 1, %s24
      %s41 = scalar_select %p38, %s40, %s24
      %p42 = scmp.ge.s32.totalorder %s41, 2
      %s43 = scalar_select %p42, 0, %s41
      %s44 = ssub.s32 1, %s24
      %s45 = smul.u32 %s26, %s44
      %s46 = ssub.s32 0, %s26
      %s47 = smul.u32 %s46, %s24
      %s48 = sadd.s32 %s45, %s47
      %s49 = ssub.s32 1, %s43
      %s50 = smul.u32 %s35, %s49
      %s51 = ssub.s32 0, %s35
      %s52 = smul.u32 %s51, %s43
      %s53 = sadd.s32 %s50, %s52
      %s54 = ssub.s32 %s24, %s43
      %s55 = ssub.s32 %s48, %s53
      %s56 = sor.u32 %s54, %s55
      %s57 = ssub.s32 %s25, %s39
      %s58 = sor.u32 %s56, %s57
      %p59 = scmp.eq.s32.totalorder %s58, 0
      %s61 = sadd.s32 %s60, 1
      %s62 = scalar_select %p59, %s60, %s61
      %p65 = pneg %p59
      %p66 = scmp.eq.s32.totalorder %s17, 1
      %p67 = por %p65, %p66
      %p68 = scmp.ne.s32.totalorder %s60, %s63
      %p69 = scmp.eq.s32.totalorder %s17, 0
      %p70 = por %p68, %p69
      %p71 = scmp.ne.s32.totalorder %s60, %s63
      %p72 = scmp.eq.s32.totalorder %s22, 1
      %p73 = por %p71, %p72
      %p74 = scmp.ne.s32.totalorder %s63, %s64
      %p75 = scmp.eq.s32.totalorder %s22, 0
      %p76 = por %p74, %p75
      %p77 = scmp.ne.s32.totalorder %s63, %s64
      %p78 = scmp.eq.s32.totalorder %s23, 1
      %p79 = por %p77, %p78
      %p81 = scmp.ne.s32.totalorder %s64, %s80
      %p82 = scmp.eq.s32.totalorder %s23, 0
      %p83 = por %p81, %p82
      %s84 = ssub.s32 %s24, %s43
      %p85 = scmp.eq.s32.totalorder %s84, 0
      %s87 = sadd.s32 %s86, 1
      %s88 = scalar_select %p85, %s86, %s87
      %p91 = pneg %p85
      %p92 = scmp.eq.s32.totalorder %s17, 1
      %p93 = por %p91, %p92
      %p94 = scmp.ne.s32.totalorder %s86, %s89
      %p95 = scmp.eq.s32.totalorder %s17, 0
      %p96 = por %p94, %p95
      %p97 = scmp.ne.s32.totalorder %s86, %s89
      %p98 = scmp.eq.s32.totalorder %s22, 1
      %p99 = por %p97, %p98
      %p100 = scmp.ne.s32.totalorder %s89, %s90
      %p101 = scmp.eq.s32.totalorder %s22, 0
      %p102 = por %p100, %p101
      %p103 = scmp.ne.s32.totalorder %s89, %s90
      %p104 = scmp.eq.s32.totalorder %s23, 1
      %p105 = por %p103, %p104
      %p107 = scmp.ne.s32.totalorder %s90, %s106
      %p108 = scmp.eq.s32.totalorder %s23, 0
      %p109 = por %p107, %p108
      %s110 = ssub.s32 1, %s24
      %s111 = smul.u32 %s26, %s110
      %s112 = ssub.s32 0, %s26
      %s113 = smul.u32 %s112, %s24
      %s114 = sadd.s32 %s111, %s113
      %s115 = ssub.s32 1, %s43
      %s116 = smul.u32 %s35, %s115
      %s117 = ssub.s32 0, %s35
      %s118 = smul.u32 %s117, %s43
      %s119 = sadd.s32 %s116, %s118
      %s120 = ssub.s32 %s24, %s43
      %s121 = ssub.s32 %s114, %s119
      %s122 = sor.u32 %s120, %s121
      %s123 = ssub.s32 %s25, %s39
      %s124 = sor.u32 %s122, %s123
      %p125 = scmp.eq.s32.totalorder %s124, 0
      %s127 = sadd.s32 %s126, 1
      %s128 = scalar_select %p125, %s126, %s127
      %p131 = pneg %p125
      %p132 = scmp.eq.s32.totalorder %s17, 1
      %p133 = por %p131, %p132
      %p134 = scmp.ne.s32.totalorder %s126, %s129
      %p135 = scmp.eq.s32.totalorder %s17, 0
      %p136 = por %p134, %p135
      %p137 = scmp.ne.s32.totalorder %s126, %s129
      %p138 = scmp.eq.s32.totalorder %s22, 1
      %p139 = por %p137, %p138
      %p140 = scmp.ne.s32.totalorder %s129, %s130
      %p141 = scmp.eq.s32.totalorder %s22, 0
      %p142 = por %p140, %p141
      %p143 = scmp.ne.s32.totalorder %s129, %s130
      %p144 = scmp.eq.s32.totalorder %s23, 1
      %p145 = por %p143, %p144
      %p147 = scmp.ne.s32.totalorder %s130, %s146
      %p148 = scmp.eq.s32.totalorder %s23, 0
      %p149 = por %p147, %p148
      %p150 = scmp.le.s32.totalorder 1, %s17
      %p151 = scmp.lt.s32.totalorder %s17, 3
      %p152 = pnand %p150, %p151
      %p153 = pneg %p152
      // Predicated region
      $region9: #{tpu_custom_call.1} parent=5 // pred_check
        _
      $region10: #{tpu_custom_call.1} parent=5 // pred_check_branch
        %155 = sbr.rel (%p152) target = $region12
      $region11: #{tpu_custom_call.1} parent=5 // pred_region
        %s156 = ssub.s32 %s17, 1
      $region12: #{tpu_custom_call.1} parent=5 // pred_fallthru
        _
      %p157 = scmp.lt.s32.totalorder %s17, 2
      // Predicated region
      $region13: #{tpu_custom_call.1} parent=5 // pred_check
        %p158 = pneg %p157
      $region14: #{tpu_custom_call.1} parent=5 // pred_check_branch
        %160 = sbr.rel (%p158) target = $region16
      $region15: #{tpu_custom_call.1} parent=5 // pred_region
        // Predicated region
        $region17: #{tpu_custom_call.1} parent=15 // pred_check
          %p161 = pneg %p70
        $region18: #{tpu_custom_call.1} parent=15 // pred_check_branch
          %163 = sbr.rel (%p161) target = $region20
        $region19: #{tpu_custom_call.1} parent=15 // pred_region
          %s164 = sand.u32 %s60, 1
          %s165 = scalar_lea.sflag [#allocation5], %s164
          %s166 = sand.u32 %s60, 1
          %s167 = smul.addr %s166, 16
          %s168 = scalar_lea.vmem [#allocation4], %s167
          %s169 = ssub.s32 1, %s24
          %s170 = smul.u32 %s26, %s169
          %s171 = ssub.s32 0, %s26
          %s172 = smul.u32 %s171, %s24
          %s173 = sadd.s32 %s170, %s172
          %s174 = smul.u32 8, %s173
          %s176 = ssub.s32 256, 256
          %177 = vsyncadd %s165, %s176
          %s178 = sadd.s32 %s25, %s174
          %s179 = smul.addr %s24, 8
          %s180 = sadd.s32 %s178, %s179
          %s181 = smul.addr %s180, 32
          %s182 = scalar_lea.hbm %s0, %s181
          %s183 = sshll.u32 %s168, 4
          %s184 = int_to_ptr.vmem [resolvable:$true] %s183
          %189 = dma.hbm_to_vmem [thread:$0]  %s182, 256, %s184, %s165, 32, 32, 2
        $region20: #{tpu_custom_call.1} parent=15 // pred_fallthru
          _
        // Predicated region
        $region21: #{tpu_custom_call.1} parent=15 // pred_check
          %p190 = pneg %p96
        $region22: #{tpu_custom_call.1} parent=15 // pred_check_branch
          %192 = sbr.rel (%p190) target = $region24
        $region23: #{tpu_custom_call.1} parent=15 // pred_region
          %s193 = sand.u32 %s86, 1
          %s194 = scalar_lea.sflag [#allocation8], %s193
          %s195 = sand.u32 %s86, 1
          %s196 = smul.addr %s195, 32
          %s197 = scalar_lea.vmem [#allocation7], %s196
          %s199 = ssub.s32 512, 512
          %200 = vsyncadd %s194, %s199
          %s201 = smul.addr %s24, 4
          %s202 = smul.addr %s201, 128
          %s203 = scalar_lea.hbm %s1, %s202
          %s204 = sshll.u32 %s197, 4
          %s205 = int_to_ptr.vmem [resolvable:$true] %s204
          %210 = dma.hbm_to_vmem [thread:$0]  %s203, 512, %s205, %s194, 128, 128, 8
        $region24: #{tpu_custom_call.1} parent=15 // pred_fallthru
          _
      $region16: #{tpu_custom_call.1} parent=5 // pred_fallthru
        _
      %p211 = scmp.le.s32.totalorder 1, %s17
      %p212 = scmp.lt.s32.totalorder %s17, 3
      %p213 = pnand %p211, %p212
      %p214 = pneg %p213
      // Predicated region
      $region25: #{tpu_custom_call.1} parent=5 // pred_check
        _
      $region26: #{tpu_custom_call.1} parent=5 // pred_check_branch
        %216 = sbr.rel (%p213) target = $region28
      $region27: #{tpu_custom_call.1} parent=5 // pred_region
        %s217 = ssub.s32 %s17, 1
        %s218 = sand.u32 %s63, 1
        %s219 = scalar_lea.sflag [#allocation5], %s218
        %s220 = sand.u32 %s63, 1
        %s221 = smul.addr %s220, 16
        %s222 = scalar_lea.vmem [#allocation4], %s221
        // Predicated region
        $region29: #{tpu_custom_call.1} parent=27 // pred_check
          %p223 = pneg %p76
        $region30: #{tpu_custom_call.1} parent=27 // pred_check_branch
          %225 = sbr.rel (%p223) target = $region32
        $region31: #{tpu_custom_call.1} parent=27 // pred_region
          %226 = dma.done %s219, 256
        $region32: #{tpu_custom_call.1} parent=27 // pred_fallthru
          _
        %s227 = sand.u32 %s89, 1
        %s228 = scalar_lea.sflag [#allocation8], %s227
        %s229 = sand.u32 %s89, 1
        %s230 = smul.addr %s229, 32
        %s231 = scalar_lea.vmem [#allocation7], %s230
        // Predicated region
        $region33: #{tpu_custom_call.1} parent=27 // pred_check
          %p232 = pneg %p102
        $region34: #{tpu_custom_call.1} parent=27 // pred_check_branch
          %234 = sbr.rel (%p232) target = $region36
        $region35: #{tpu_custom_call.1} parent=27 // pred_region
          %235 = dma.done %s228, 512
        $region36: #{tpu_custom_call.1} parent=27 // pred_fallthru
          _
        %s236 = sand.u32 %s63, 1
        %s237 = scalar_lea.sflag [#allocation5], %s236
        %s238 = sand.u32 %s63, 1
        %s239 = smul.addr %s238, 16
        %s240 = scalar_lea.vmem [#allocation4], %s239
        %p241 = pneg %p76
        %p242 = pneg %p73
        %s243 = sand.u32 %s89, 1
        %s244 = scalar_lea.sflag [#allocation8], %s243
        %s245 = sand.u32 %s89, 1
        %s246 = smul.addr %s245, 32
        %s247 = scalar_lea.vmem [#allocation7], %s246
        %p248 = pneg %p102
        %p249 = pneg %p99
        %p250 = pneg %p142
        %p251 = pneg %p139
        %s252 = sand.u32 %s129, 1
        %s253 = scalar_lea.sflag [#allocation6], %s252
        %s254 = sand.u32 %s129, 1
        %s255 = smul.addr %s254, 16
        %s256 = scalar_lea.vmem [#allocation9], %s255
        %s257 = ssub.s32 1, %s27
        %s258 = smul.u32 %s29, %s257
        %s259 = ssub.s32 0, %s29
        %s260 = smul.u32 %s259, %s27
        %s261 = sadd.s32 %s258, %s260
        %s262 = smul.u32 8, %s261
        %s263 = ssub.s32 1, %s27
        %s264 = smul.u32 %s29, %s263
        %s265 = ssub.s32 0, %s29
        %s266 = smul.u32 %s265, %s27
        %s267 = sadd.s32 %s264, %s266
        %s268 = smul.u32 8, %s267
        %p269 = scmp.eq.s32.totalorder %s29, 0
        // Predicated region
        $region37: #{tpu_custom_call.1} parent=27 // pred_check
          %p270 = pneg %p269
        $region38: #{tpu_custom_call.1} parent=27 // pred_check_branch
          %272 = sbr.rel (%p270) target = $region40
        $region39: #{tpu_custom_call.1} parent=27 // pred_region
          %vm273 = vcmask 254976
          %274 = vst.msk [vmem:[#allocation2] sm:$0x3] %vm273, 0.0
          %275 = vst.msk [vmem:[#allocation3] sm:$0x3] %vm273, 0.0
        $region40: #{tpu_custom_call.1} parent=27 // pred_fallthru
          _
        %v276 = vld [vmem:[%s231] sm:$0xff]
        %v277 = vld [vmem:[%s231 + $0x8] sm:$0xff]
        %v278 = vld [vmem:[%s231 + $0x10] sm:$0xff]
        %v279 = vld [vmem:[%s231 + $0x18] sm:$0xff]
        %v280 = vld [vmem:[#allocation2] sm:$0x3]
        %v281 = vld [vmem:[#allocation3] sm:$0x3]
        %s282 = smul.u32 %s27, 7
        %s283 = smul.u32 %s282, 2
        %s284 = scalar_lea.vmem %s222, %s283 [#allocation4]
        %v285 = vld [vmem:[%s284] sm:$0x3]
        %vm286 = vcmask 261120
        %v288 = vsel %vm286, %v280, 0
        %290 = vmatprep.subr.mxu0 0.0
        %291 = vmatpush1.msra.mxu0 %v276
        %292 = vmatprep.subr.mxu0 0.0
        %293 = vmatpush1.msra.mxu0 %v277
        %294 = vmatprep.subr.mxu0 0.0
        %295 = vmatpush1.msra.mxu0 %v278
        %296 = vmatprep.subr.mxu0 0.0
        %297 = vmatpush1.msra.mxu0 %v279
        %298 = vmatprep.subr.mxu0 0.0
        %299 = vmatpush1.msra.mxu0 0.0
        %300 = vmatprep.subr.mxu0 0.0
        %301 = vmatpush1.msra.mxu0 0.0
        %302 = vmatprep.subr.mxu0 0.0
        %303 = vmatpush1.msra.mxu0 0.0
        %304 = vmatprep.subr.mxu0 0.0
        %305 = vmatpush1.msra.mxu0 0.0
        %306 = vmatprep.subr.mxu0 0.0
        %307 = vmatpush1.msra.mxu0 0.0
        %308 = vmatprep.subr.mxu0 0.0
        %309 = vmatpush1.msra.mxu0 0.0
        %310 = vmatprep.subr.mxu0 0.0
        %311 = vmatpush1.msra.mxu0 0.0
        %312 = vmatprep.subr.mxu0 0.0
        %313 = vmatpush1.msra.mxu0 0.0
        %314 = vmatprep.subr.mxu0 0.0
        %315 = vmatpush1.msra.mxu0 0.0
        %316 = vmatprep.subr.mxu0 0.0
        %317 = vmatpush1.msra.mxu0 0.0
        %318 = vmatprep.subr.mxu0 0.0
        %319 = vmatpush1.msra.mxu0 0.0
        %320 = vmatprep.subr.mxu0 0.0
        %321 = vmatpush1.msra.mxu0 0.0
        %322 = vmatprep.subr.mxu0 0.0
        %323 = vmatpush1.msra.mxu0 0.0
        %324 = vmatprep.subr.mxu0 0.0
        %325 = vmatpush1.msra.mxu0 0.0
        %326 = vmatprep.subr.mxu0 0.0
        %327 = vmatpush1.msra.mxu0 0.0
        %328 = vmatprep.subr.mxu0 0.0
        %329 = vmatpush1.msra.mxu0 0.0
        %330 = vmatprep.subr.mxu0 0.0
        %331 = vmatpush1.msra.mxu0 0.0
        %332 = vmatprep.subr.mxu0 0.0
        %333 = vmatpush1.msra.mxu0 0.0
        %334 = vmatprep.subr.mxu0 0.0
        %335 = vmatpush1.msra.mxu0 0.0
        %336 = vmatprep.subr.mxu0 0.0
        %337 = vmatpush1.msra.mxu0 0.0
        %338 = vmatprep.subr.mxu0 0.0
        %339 = vmatpush1.msra.mxu0 0.0
        %340 = vmatprep.subr.mxu0 0.0
        %341 = vmatpush1.msra.mxu0 0.0
        %342 = vmatprep.subr.mxu0 0.0
        %343 = vmatpush1.msra.mxu0 0.0
        %344 = vmatprep.subr.mxu0 0.0
        %345 = vmatpush1.msra.mxu0 0.0
        %346 = vmatprep.subr.mxu0 0.0
        %347 = vmatpush1.msra.mxu0 0.0
        %348 = vmatprep.subr.mxu0 0.0
        %349 = vmatpush1.msra.mxu0 0.0
        %350 = vmatprep.subr.mxu0 0.0
        %351 = vmatpush1.msra.mxu0 0.0
        %352 = vmatprep.subr.mxu0 0.0
        %353 = vmatpush1.msra.mxu0 0.0
        %354 = vmatprep.mubr.f32.mxu0 0.0
        %355 = vmatmul.mubr.f32.gmra.mrb[0].mxu0 %v288
        %v356 = vpop.f32.mrb[0].mxu0
        %v357 = vadd.f32 0.0, %v356
        %v358 = vpop.f32.mrb[0].mxu0
        %359 = vdwg.mxu0
        %v360 = vadd.f32 %v285, %v357
        %v361 = vxor.u32 %v360, 2147483648
        %v362 = vmul.f32 %v361, 1.442695
        %v363 = vpow.pop %v362
        %v364 = vadd.f32 %v363, 1.0
        %v365 = vrcp.pop %v364
        %v366 = vmul.f32 1.0, %v365
        %v367 = vtanh.pop %v360
        %369 = vrot.lane.b32.xlu0 %v281, 32
        %v370 = vpop.permute.xlu0 %369
        %v372 = vmul.f32 %v366, %v370
        %374 = vrot.lane.b32.xlu0 %v367, 32
        %v375 = vpop.permute.xlu0 %374
        %v377 = vmul.f32 %v366, %v375
        %379 = vrot.lane.b32.xlu0 %v377, 32
        %v380 = vpop.permute.xlu0 %379
        %v382 = vadd.f32 %v372, %v380
        %v383 = vtanh.pop %v382
        %385 = vrot.lane.b32.xlu0 %v383, 32
        %v386 = vpop.permute.xlu0 %385
        %v388 = vmul.f32 %v366, %v386
        %390 = vrot.lane.b32.xlu0 %v388, 64
        %v391 = vpop.permute.xlu0 %390
        %s393 = scalar_lea.vmem %s256, %s283 [#allocation9]
        %vm394 = vcmask 254976
        %395 = vst.msk [vmem:[%s393] sm:$0x3] %vm394, %v391
        %s396 = smul.u32 %s27, 5
        %s397 = sadd.s32 %s396, 1
        %s398 = smul.u32 %s397, 2
        %s399 = scalar_lea.vmem %s222, %s398 [#allocation4]
        %v400 = vld [vmem:[%s399] sm:$0x3]
        %v401 = vsel %vm286, %v391, 0
        %403 = vmatprep.subr.mxu0 0.0
        %404 = vmatpush1.msra.mxu0 %v276
        %405 = vmatprep.subr.mxu0 0.0
        %406 = vmatpush1.msra.mxu0 %v277
        %407 = vmatprep.subr.mxu0 0.0
        %408 = vmatpush1.msra.mxu0 %v278
        %409 = vmatprep.subr.mxu0 0.0
        %410 = vmatpush1.msra.mxu0 %v279
        %411 = vmatprep.subr.mxu0 0.0
        %412 = vmatpush1.msra.mxu0 0.0
        %413 = vmatprep.subr.mxu0 0.0
        %414 = vmatpush1.msra.mxu0 0.0
        %415 = vmatprep.subr.mxu0 0.0
        %416 = vmatpush1.msra.mxu0 0.0
        %417 = vmatprep.subr.mxu0 0.0
        %418 = vmatpush1.msra.mxu0 0.0
        %419 = vmatprep.subr.mxu0 0.0
        %420 = vmatpush1.msra.mxu0 0.0
        %421 = vmatprep.subr.mxu0 0.0
        %422 = vmatpush1.msra.mxu0 0.0
        %423 = vmatprep.subr.mxu0 0.0
        %424 = vmatpush1.msra.mxu0 0.0
        %425 = vmatprep.subr.mxu0 0.0
        %426 = vmatpush1.msra.mxu0 0.0
        %427 = vmatprep.subr.mxu0 0.0
        %428 = vmatpush1.msra.mxu0 0.0
        %429 = vmatprep.subr.mxu0 0.0
        %430 = vmatpush1.msra.mxu0 0.0
        %431 = vmatprep.subr.mxu0 0.0
        %432 = vmatpush1.msra.mxu0 0.0
        %433 = vmatprep.subr.mxu0 0.0
        %434 = vmatpush1.msra.mxu0 0.0
        %435 = vmatprep.subr.mxu0 0.0
        %436 = vmatpush1.msra.mxu0 0.0
        %437 = vmatprep.subr.mxu0 0.0
        %438 = vmatpush1.msra.mxu0 0.0
        %439 = vmatprep.subr.mxu0 0.0
        %440 = vmatpush1.msra.mxu0 0.0
        %441 = vmatprep.subr.mxu0 0.0
        %442 = vmatpush1.msra.mxu0 0.0
        %443 = vmatprep.subr.mxu0 0.0
        %444 = vmatpush1.msra.mxu0 0.0
        %445 = vmatprep.subr.mxu0 0.0
        %446 = vmatpush1.msra.mxu0 0.0
        %447 = vmatprep.subr.mxu0 0.0
        %448 = vmatpush1.msra.mxu0 0.0
        %449 = vmatprep.subr.mxu0 0.0
        %450 = vmatpush1.msra.mxu0 0.0
        %451 = vmatprep.subr.mxu0 0.0
        %452 = vmatpush1.msra.mxu0 0.0
        %453 = vmatprep.subr.mxu0 0.0
        %454 = vmatpush1.msra.mxu0 0.0
        %455 = vmatprep.subr.mxu0 0.0
        %456 = vmatpush1.msra.mxu0 0.0
        %457 = vmatprep.subr.mxu0 0.0
        %458 = vmatpush1.msra.mxu0 0.0
        %459 = vmatprep.subr.mxu0 0.0
        %460 = vmatpush1.msra.mxu0 0.0
        %461 = vmatprep.subr.mxu0 0.0
        %462 = vmatpush1.msra.mxu0 0.0
        %463 = vmatprep.subr.mxu0 0.0
        %464 = vmatpush1.msra.mxu0 0.0
        %465 = vmatprep.subr.mxu0 0.0
        %466 = vmatpush1.msra.mxu0 0.0
        %467 = vmatprep.mubr.f32.mxu0 0.0
        %468 = vmatmul.mubr.f32.gmra.mrb[0].mxu0 %v401
        %v469 = vpop.f32.mrb[0].mxu0
        %v470 = vadd.f32 0.0, %v469
        %v471 = vpop.f32.mrb[0].mxu0
        %472 = vdwg.mxu0
        %v473 = vadd.f32 %v400, %v470
        %v474 = vxor.u32 %v473, 2147483648
        %v475 = vmul.f32 %v474, 1.442695
        %v476 = vpow.pop %v475
        %v477 = vadd.f32 %v476, 1.0
        %v478 = vrcp.pop %v477
        %v479 = vmul.f32 1.0, %v478
        %v480 = vtanh.pop %v473
        %v481 = vmul.f32 %v479, %v382
        %483 = vrot.lane.b32.xlu0 %v480, 32
        %v484 = vpop.permute.xlu0 %483
        %v486 = vmul.f32 %v479, %v484
        %488 = vrot.lane.b32.xlu0 %v486, 32
        %v489 = vpop.permute.xlu0 %488
        %v491 = vadd.f32 %v481, %v489
        %v492 = vtanh.pop %v491
        %494 = vrot.lane.b32.xlu0 %v492, 32
        %v495 = vpop.permute.xlu0 %494
        %v497 = vmul.f32 %v479, %v495
        %499 = vrot.lane.b32.xlu0 %v497, 64
        %v500 = vpop.permute.xlu0 %499
        %s502 = scalar_lea.vmem %s256, %s398 [#allocation9]
        %503 = vst.msk [vmem:[%s502] sm:$0x3] %vm394, %v500
        %s504 = smul.u32 %s27, 3
        %s505 = sadd.s32 %s504, 2
        %s506 = smul.u32 %s505, 2
        %s507 = scalar_lea.vmem %s222, %s506 [#allocation4]
        %v508 = vld [vmem:[%s507] sm:$0x3]
        %v509 = vsel %vm286, %v500, 0
        %511 = vmatprep.subr.mxu0 0.0
        %512 = vmatpush1.msra.mxu0 %v276
        %513 = vmatprep.subr.mxu0 0.0
        %514 = vmatpush1.msra.mxu0 %v277
        %515 = vmatprep.subr.mxu0 0.0
        %516 = vmatpush1.msra.mxu0 %v278
        %517 = vmatprep.subr.mxu0 0.0
        %518 = vmatpush1.msra.mxu0 %v279
        %519 = vmatprep.subr.mxu0 0.0
        %520 = vmatpush1.msra.mxu0 0.0
        %521 = vmatprep.subr.mxu0 0.0
        %522 = vmatpush1.msra.mxu0 0.0
        %523 = vmatprep.subr.mxu0 0.0
        %524 = vmatpush1.msra.mxu0 0.0
        %525 = vmatprep.subr.mxu0 0.0
        %526 = vmatpush1.msra.mxu0 0.0
        %527 = vmatprep.subr.mxu0 0.0
        %528 = vmatpush1.msra.mxu0 0.0
        %529 = vmatprep.subr.mxu0 0.0
        %530 = vmatpush1.msra.mxu0 0.0
        %531 = vmatprep.subr.mxu0 0.0
        %532 = vmatpush1.msra.mxu0 0.0
        %533 = vmatprep.subr.mxu0 0.0
        %534 = vmatpush1.msra.mxu0 0.0
        %535 = vmatprep.subr.mxu0 0.0
        %536 = vmatpush1.msra.mxu0 0.0
        %537 = vmatprep.subr.mxu0 0.0
        %538 = vmatpush1.msra.mxu0 0.0
        %539 = vmatprep.subr.mxu0 0.0
        %540 = vmatpush1.msra.mxu0 0.0
        %541 = vmatprep.subr.mxu0 0.0
        %542 = vmatpush1.msra.mxu0 0.0
        %543 = vmatprep.subr.mxu0 0.0
        %544 = vmatpush1.msra.mxu0 0.0
        %545 = vmatprep.subr.mxu0 0.0
        %546 = vmatpush1.msra.mxu0 0.0
        %547 = vmatprep.subr.mxu0 0.0
        %548 = vmatpush1.msra.mxu0 0.0
        %549 = vmatprep.subr.mxu0 0.0
        %550 = vmatpush1.msra.mxu0 0.0
        %551 = vmatprep.subr.mxu0 0.0
        %552 = vmatpush1.msra.mxu0 0.0
        %553 = vmatprep.subr.mxu0 0.0
        %554 = vmatpush1.msra.mxu0 0.0
        %555 = vmatprep.subr.mxu0 0.0
        %556 = vmatpush1.msra.mxu0 0.0
        %557 = vmatprep.subr.mxu0 0.0
        %558 = vmatpush1.msra.mxu0 0.0
        %559 = vmatprep.subr.mxu0 0.0
        %560 = vmatpush1.msra.mxu0 0.0
        %561 = vmatprep.subr.mxu0 0.0
        %562 = vmatpush1.msra.mxu0 0.0
        %563 = vmatprep.subr.mxu0 0.0
        %564 = vmatpush1.msra.mxu0 0.0
        %565 = vmatprep.subr.mxu0 0.0
        %566 = vmatpush1.msra.mxu0 0.0
        %567 = vmatprep.subr.mxu0 0.0
        %568 = vmatpush1.msra.mxu0 0.0
        %569 = vmatprep.subr.mxu0 0.0
        %570 = vmatpush1.msra.mxu0 0.0
        %571 = vmatprep.subr.mxu0 0.0
        %572 = vmatpush1.msra.mxu0 0.0
        %573 = vmatprep.subr.mxu0 0.0
        %574 = vmatpush1.msra.mxu0 0.0
        %575 = vmatprep.mubr.f32.mxu0 0.0
        %576 = vmatmul.mubr.f32.gmra.mrb[0].mxu0 %v509
        %v577 = vpop.f32.mrb[0].mxu0
        %v578 = vadd.f32 0.0, %v577
        %v579 = vpop.f32.mrb[0].mxu0
        %580 = vdwg.mxu0
        %v581 = vadd.f32 %v508, %v578
        %v582 = vxor.u32 %v581, 2147483648
        %v583 = vmul.f32 %v582, 1.442695
        %v584 = vpow.pop %v583
        %v585 = vadd.f32 %v584, 1.0
        %v586 = vrcp.pop %v585
        %v587 = vmul.f32 1.0, %v586
        %v588 = vtanh.pop %v581
        %v589 = vmul.f32 %v587, %v491
        %591 = vrot.lane.b32.xlu0 %v588, 32
        %v592 = vpop.permute.xlu0 %591
        %v594 = vmul.f32 %v587, %v592
        %596 = vrot.lane.b32.xlu0 %v594, 32
        %v597 = vpop.permute.xlu0 %596
        %v599 = vadd.f32 %v589, %v597
        %v600 = vtanh.pop %v599
        %602 = vrot.lane.b32.xlu0 %v600, 32
        %v603 = vpop.permute.xlu0 %602
        %v605 = vmul.f32 %v587, %v603
        %607 = vrot.lane.b32.xlu0 %v605, 64
        %v608 = vpop.permute.xlu0 %607
        %s610 = scalar_lea.vmem %s256, %s506 [#allocation9]
        %611 = vst.msk [vmem:[%s610] sm:$0x3] %vm394, %v608
        %s612 = sadd.s32 %s27, 3
        %s613 = smul.u32 %s612, 2
        %s614 = scalar_lea.vmem %s222, %s613 [#allocation4]
        %v615 = vld [vmem:[%s614] sm:$0x3]
        %v616 = vsel %vm286, %v608, 0
        %618 = vmatprep.subr.mxu0 0.0
        %619 = vmatpush1.msra.mxu0 %v276
        %620 = vmatprep.subr.mxu0 0.0
        %621 = vmatpush1.msra.mxu0 %v277
        %622 = vmatprep.subr.mxu0 0.0
        %623 = vmatpush1.msra.mxu0 %v278
        %624 = vmatprep.subr.mxu0 0.0
        %625 = vmatpush1.msra.mxu0 %v279
        %626 = vmatprep.subr.mxu0 0.0
        %627 = vmatpush1.msra.mxu0 0.0
        %628 = vmatprep.subr.mxu0 0.0
        %629 = vmatpush1.msra.mxu0 0.0
        %630 = vmatprep.subr.mxu0 0.0
        %631 = vmatpush1.msra.mxu0 0.0
        %632 = vmatprep.subr.mxu0 0.0
        %633 = vmatpush1.msra.mxu0 0.0
        %634 = vmatprep.subr.mxu0 0.0
        %635 = vmatpush1.msra.mxu0 0.0
        %636 = vmatprep.subr.mxu0 0.0
        %637 = vmatpush1.msra.mxu0 0.0
        %638 = vmatprep.subr.mxu0 0.0
        %639 = vmatpush1.msra.mxu0 0.0
        %640 = vmatprep.subr.mxu0 0.0
        %641 = vmatpush1.msra.mxu0 0.0
        %642 = vmatprep.subr.mxu0 0.0
        %643 = vmatpush1.msra.mxu0 0.0
        %644 = vmatprep.subr.mxu0 0.0
        %645 = vmatpush1.msra.mxu0 0.0
        %646 = vmatprep.subr.mxu0 0.0
        %647 = vmatpush1.msra.mxu0 0.0
        %648 = vmatprep.subr.mxu0 0.0
        %649 = vmatpush1.msra.mxu0 0.0
        %650 = vmatprep.subr.mxu0 0.0
        %651 = vmatpush1.msra.mxu0 0.0
        %652 = vmatprep.subr.mxu0 0.0
        %653 = vmatpush1.msra.mxu0 0.0
        %654 = vmatprep.subr.mxu0 0.0
        %655 = vmatpush1.msra.mxu0 0.0
        %656 = vmatprep.subr.mxu0 0.0
        %657 = vmatpush1.msra.mxu0 0.0
        %658 = vmatprep.subr.mxu0 0.0
        %659 = vmatpush1.msra.mxu0 0.0
        %660 = vmatprep.subr.mxu0 0.0
        %661 = vmatpush1.msra.mxu0 0.0
        %662 = vmatprep.subr.mxu0 0.0
        %663 = vmatpush1.msra.mxu0 0.0
        %664 = vmatprep.subr.mxu0 0.0
        %665 = vmatpush1.msra.mxu0 0.0
        %666 = vmatprep.subr.mxu0 0.0
        %667 = vmatpush1.msra.mxu0 0.0
        %668 = vmatprep.subr.mxu0 0.0
        %669 = vmatpush1.msra.mxu0 0.0
        %670 = vmatprep.subr.mxu0 0.0
        %671 = vmatpush1.msra.mxu0 0.0
        %672 = vmatprep.subr.mxu0 0.0
        %673 = vmatpush1.msra.mxu0 0.0
        %674 = vmatprep.subr.mxu0 0.0
        %675 = vmatpush1.msra.mxu0 0.0
        %676 = vmatprep.subr.mxu0 0.0
        %677 = vmatpush1.msra.mxu0 0.0
        %678 = vmatprep.subr.mxu0 0.0
        %679 = vmatpush1.msra.mxu0 0.0
        %680 = vmatprep.subr.mxu0 0.0
        %681 = vmatpush1.msra.mxu0 0.0
        %682 = vmatprep.mubr.f32.mxu0 0.0
        %683 = vmatmul.mubr.f32.gmra.mrb[0].mxu0 %v616
        %v684 = vpop.f32.mrb[0].mxu0
        %v685 = vadd.f32 0.0, %v684
        %v686 = vpop.f32.mrb[0].mxu0
        %687 = vdwg.mxu0
        %v688 = vadd.f32 %v615, %v685
        %v689 = vxor.u32 %v688, 2147483648
        %v690 = vmul.f32 %v689, 1.442695
        %v691 = vpow.pop %v690
        %v692 = vadd.f32 %v691, 1.0
        %v693 = vrcp.pop %v692
        %v694 = vmul.f32 1.0, %v693
        %v695 = vtanh.pop %v688
        %v696 = vmul.f32 %v694, %v599
        %698 = vrot.lane.b32.xlu0 %v695, 32
        %v699 = vpop.permute.xlu0 %698
        %v701 = vmul.f32 %v694, %v699
        %703 = vrot.lane.b32.xlu0 %v701, 32
        %v704 = vpop.permute.xlu0 %703
        %v706 = vadd.f32 %v696, %v704
        %v707 = vtanh.pop %v706
        %709 = vrot.lane.b32.xlu0 %v707, 32
        %v710 = vpop.permute.xlu0 %709
        %v712 = vmul.f32 %v694, %v710
        %714 = vrot.lane.b32.xlu0 %v712, 64
        %v715 = vpop.permute.xlu0 %714
        %s717 = scalar_lea.vmem %s256, %s613 [#allocation9]
        %718 = vst.msk [vmem:[%s717] sm:$0x3] %vm394, %v715
        %s719 = ssub.s32 4, %s27
        %s720 = smul.u32 %s719, 2
        %s721 = scalar_lea.vmem %s222, %s720 [#allocation4]
        %v722 = vld [vmem:[%s721] sm:$0x3]
        %v723 = vsel %vm286, %v715, 0
        %725 = vmatprep.subr.mxu0 0.0
        %726 = vmatpush1.msra.mxu0 %v276
        %727 = vmatprep.subr.mxu0 0.0
        %728 = vmatpush1.msra.mxu0 %v277
        %729 = vmatprep.subr.mxu0 0.0
        %730 = vmatpush1.msra.mxu0 %v278
        %731 = vmatprep.subr.mxu0 0.0
        %732 = vmatpush1.msra.mxu0 %v279
        %733 = vmatprep.subr.mxu0 0.0
        %734 = vmatpush1.msra.mxu0 0.0
        %735 = vmatprep.subr.mxu0 0.0
        %736 = vmatpush1.msra.mxu0 0.0
        %737 = vmatprep.subr.mxu0 0.0
        %738 = vmatpush1.msra.mxu0 0.0
        %739 = vmatprep.subr.mxu0 0.0
        %740 = vmatpush1.msra.mxu0 0.0
        %741 = vmatprep.subr.mxu0 0.0
        %742 = vmatpush1.msra.mxu0 0.0
        %743 = vmatprep.subr.mxu0 0.0
        %744 = vmatpush1.msra.mxu0 0.0
        %745 = vmatprep.subr.mxu0 0.0
        %746 = vmatpush1.msra.mxu0 0.0
        %747 = vmatprep.subr.mxu0 0.0
        %748 = vmatpush1.msra.mxu0 0.0
        %749 = vmatprep.subr.mxu0 0.0
        %750 = vmatpush1.msra.mxu0 0.0
        %751 = vmatprep.subr.mxu0 0.0
        %752 = vmatpush1.msra.mxu0 0.0
        %753 = vmatprep.subr.mxu0 0.0
        %754 = vmatpush1.msra.mxu0 0.0
        %755 = vmatprep.subr.mxu0 0.0
        %756 = vmatpush1.msra.mxu0 0.0
        %757 = vmatprep.subr.mxu0 0.0
        %758 = vmatpush1.msra.mxu0 0.0
        %759 = vmatprep.subr.mxu0 0.0
        %760 = vmatpush1.msra.mxu0 0.0
        %761 = vmatprep.subr.mxu0 0.0
        %762 = vmatpush1.msra.mxu0 0.0
        %763 = vmatprep.subr.mxu0 0.0
        %764 = vmatpush1.msra.mxu0 0.0
        %765 = vmatprep.subr.mxu0 0.0
        %766 = vmatpush1.msra.mxu0 0.0
        %767 = vmatprep.subr.mxu0 0.0
        %768 = vmatpush1.msra.mxu0 0.0
        %769 = vmatprep.subr.mxu0 0.0
        %770 = vmatpush1.msra.mxu0 0.0
        %771 = vmatprep.subr.mxu0 0.0
        %772 = vmatpush1.msra.mxu0 0.0
        %773 = vmatprep.subr.mxu0 0.0
        %774 = vmatpush1.msra.mxu0 0.0
        %775 = vmatprep.subr.mxu0 0.0
        %776 = vmatpush1.msra.mxu0 0.0
        %777 = vmatprep.subr.mxu0 0.0
        %778 = vmatpush1.msra.mxu0 0.0
        %779 = vmatprep.subr.mxu0 0.0
        %780 = vmatpush1.msra.mxu0 0.0
        %781 = vmatprep.subr.mxu0 0.0
        %782 = vmatpush1.msra.mxu0 0.0
        %783 = vmatprep.subr.mxu0 0.0
        %784 = vmatpush1.msra.mxu0 0.0
        %785 = vmatprep.subr.mxu0 0.0
        %786 = vmatpush1.msra.mxu0 0.0
        %787 = vmatprep.subr.mxu0 0.0
        %788 = vmatpush1.msra.mxu0 0.0
        %789 = vmatprep.mubr.f32.mxu0 0.0
        %790 = vmatmul.mubr.f32.gmra.mrb[0].mxu0 %v723
        %v791 = vpop.f32.mrb[0].mxu0
        %v792 = vadd.f32 0.0, %v791
        %v793 = vpop.f32.mrb[0].mxu0
        %794 = vdwg.mxu0
        %v795 = vadd.f32 %v722, %v792
        %v796 = vxor.u32 %v795, 2147483648
        %v797 = vmul.f32 %v796, 1.442695
        %v798 = vpow.pop %v797
        %v799 = vadd.f32 %v798, 1.0
        %v800 = vrcp.pop %v799
        %v801 = vmul.f32 1.0, %v800
        %v802 = vtanh.pop %v795
        %v803 = vmul.f32 %v801, %v706
        %805 = vrot.lane.b32.xlu0 %v802, 32
        %v806 = vpop.permute.xlu0 %805
        %v808 = vmul.f32 %v801, %v806
        %810 = vrot.lane.b32.xlu0 %v808, 32
        %v811 = vpop.permute.xlu0 %810
        %v813 = vadd.f32 %v803, %v811
        %v814 = vtanh.pop %v813
        %816 = vrot.lane.b32.xlu0 %v814, 32
        %v817 = vpop.permute.xlu0 %816
        %v819 = vmul.f32 %v801, %v817
        %821 = vrot.lane.b32.xlu0 %v819, 64
        %v822 = vpop.permute.xlu0 %821
        %s824 = scalar_lea.vmem %s256, %s720 [#allocation9]
        %825 = vst.msk [vmem:[%s824] sm:$0x3] %vm394, %v822
        %s826 = smul.u32 %s27, 4294967293
        %s827 = sadd.s32 %s826, 5
        %s828 = smul.u32 %s827, 2
        %s829 = scalar_lea.vmem %s222, %s828 [#allocation4]
        %v830 = vld [vmem:[%s829] sm:$0x3]
        %v831 = vsel %vm286, %v822, 0
        %833 = vmatprep.subr.mxu0 0.0
        %834 = vmatpush1.msra.mxu0 %v276
        %835 = vmatprep.subr.mxu0 0.0
        %836 = vmatpush1.msra.mxu0 %v277
        %837 = vmatprep.subr.mxu0 0.0
        %838 = vmatpush1.msra.mxu0 %v278
        %839 = vmatprep.subr.mxu0 0.0
        %840 = vmatpush1.msra.mxu0 %v279
        %841 = vmatprep.subr.mxu0 0.0
        %842 = vmatpush1.msra.mxu0 0.0
        %843 = vmatprep.subr.mxu0 0.0
        %844 = vmatpush1.msra.mxu0 0.0
        %845 = vmatprep.subr.mxu0 0.0
        %846 = vmatpush1.msra.mxu0 0.0
        %847 = vmatprep.subr.mxu0 0.0
        %848 = vmatpush1.msra.mxu0 0.0
        %849 = vmatprep.subr.mxu0 0.0
        %850 = vmatpush1.msra.mxu0 0.0
        %851 = vmatprep.subr.mxu0 0.0
        %852 = vmatpush1.msra.mxu0 0.0
        %853 = vmatprep.subr.mxu0 0.0
        %854 = vmatpush1.msra.mxu0 0.0
        %855 = vmatprep.subr.mxu0 0.0
        %856 = vmatpush1.msra.mxu0 0.0
        %857 = vmatprep.subr.mxu0 0.0
        %858 = vmatpush1.msra.mxu0 0.0
        %859 = vmatprep.subr.mxu0 0.0
        %860 = vmatpush1.msra.mxu0 0.0
        %861 = vmatprep.subr.mxu0 0.0
        %862 = vmatpush1.msra.mxu0 0.0
        %863 = vmatprep.subr.mxu0 0.0
        %864 = vmatpush1.msra.mxu0 0.0
        %865 = vmatprep.subr.mxu0 0.0
        %866 = vmatpush1.msra.mxu0 0.0
        %867 = vmatprep.subr.mxu0 0.0
        %868 = vmatpush1.msra.mxu0 0.0
        %869 = vmatprep.subr.mxu0 0.0
        %870 = vmatpush1.msra.mxu0 0.0
        %871 = vmatprep.subr.mxu0 0.0
        %872 = vmatpush1.msra.mxu0 0.0
        %873 = vmatprep.subr.mxu0 0.0
        %874 = vmatpush1.msra.mxu0 0.0
        %875 = vmatprep.subr.mxu0 0.0
        %876 = vmatpush1.msra.mxu0 0.0
        %877 = vmatprep.subr.mxu0 0.0
        %878 = vmatpush1.msra.mxu0 0.0
        %879 = vmatprep.subr.mxu0 0.0
        %880 = vmatpush1.msra.mxu0 0.0
        %881 = vmatprep.subr.mxu0 0.0
        %882 = vmatpush1.msra.mxu0 0.0
        %883 = vmatprep.subr.mxu0 0.0
        %884 = vmatpush1.msra.mxu0 0.0
        %885 = vmatprep.subr.mxu0 0.0
        %886 = vmatpush1.msra.mxu0 0.0
        %887 = vmatprep.subr.mxu0 0.0
        %888 = vmatpush1.msra.mxu0 0.0
        %889 = vmatprep.subr.mxu0 0.0
        %890 = vmatpush1.msra.mxu0 0.0
        %891 = vmatprep.subr.mxu0 0.0
        %892 = vmatpush1.msra.mxu0 0.0
        %893 = vmatprep.subr.mxu0 0.0
        %894 = vmatpush1.msra.mxu0 0.0
        %895 = vmatprep.subr.mxu0 0.0
        %896 = vmatpush1.msra.mxu0 0.0
        %897 = vmatprep.mubr.f32.mxu0 0.0
        %898 = vmatmul.mubr.f32.gmra.mrb[0].mxu0 %v831
        %v899 = vpop.f32.mrb[0].mxu0
        %v900 = vadd.f32 0.0, %v899
        %v901 = vpop.f32.mrb[0].mxu0
        %902 = vdwg.mxu0
        %v903 = vadd.f32 %v830, %v900
        %v904 = vxor.u32 %v903, 2147483648
        %v905 = vmul.f32 %v904, 1.442695
        %v906 = vpow.pop %v905
        %v907 = vadd.f32 %v906, 1.0
        %v908 = vrcp.pop %v907
        %v909 = vmul.f32 1.0, %v908
        %v910 = vtanh.pop %v903
        %v911 = vmul.f32 %v909, %v813
        %913 = vrot.lane.b32.xlu0 %v910, 32
        %v914 = vpop.permute.xlu0 %913
        %v916 = vmul.f32 %v909, %v914
        %918 = vrot.lane.b32.xlu0 %v916, 32
        %v919 = vpop.permute.xlu0 %918
        %v921 = vadd.f32 %v911, %v919
        %v922 = vtanh.pop %v921
        %924 = vrot.lane.b32.xlu0 %v922, 32
        %v925 = vpop.permute.xlu0 %924
        %v927 = vmul.f32 %v909, %v925
        %929 = vrot.lane.b32.xlu0 %v927, 64
        %v930 = vpop.permute.xlu0 %929
        %s932 = scalar_lea.vmem %s256, %s828 [#allocation9]
        %933 = vst.msk [vmem:[%s932] sm:$0x3] %vm394, %v930
        %s934 = smul.u32 %s27, 4294967291
        %s935 = sadd.s32 %s934, 6
        %s936 = smul.u32 %s935, 2
        %s937 = scalar_lea.vmem %s222, %s936 [#allocation4]
        %v938 = vld [vmem:[%s937] sm:$0x3]
        %v939 = vsel %vm286, %v930, 0
        %941 = vmatprep.subr.mxu0 0.0
        %942 = vmatpush1.msra.mxu0 %v276
        %943 = vmatprep.subr.mxu0 0.0
        %944 = vmatpush1.msra.mxu0 %v277
        %945 = vmatprep.subr.mxu0 0.0
        %946 = vmatpush1.msra.mxu0 %v278
        %947 = vmatprep.subr.mxu0 0.0
        %948 = vmatpush1.msra.mxu0 %v279
        %949 = vmatprep.subr.mxu0 0.0
        %950 = vmatpush1.msra.mxu0 0.0
        %951 = vmatprep.subr.mxu0 0.0
        %952 = vmatpush1.msra.mxu0 0.0
        %953 = vmatprep.subr.mxu0 0.0
        %954 = vmatpush1.msra.mxu0 0.0
        %955 = vmatprep.subr.mxu0 0.0
        %956 = vmatpush1.msra.mxu0 0.0
        %957 = vmatprep.subr.mxu0 0.0
        %958 = vmatpush1.msra.mxu0 0.0
        %959 = vmatprep.subr.mxu0 0.0
        %960 = vmatpush1.msra.mxu0 0.0
        %961 = vmatprep.subr.mxu0 0.0
        %962 = vmatpush1.msra.mxu0 0.0
        %963 = vmatprep.subr.mxu0 0.0
        %964 = vmatpush1.msra.mxu0 0.0
        %965 = vmatprep.subr.mxu0 0.0
        %966 = vmatpush1.msra.mxu0 0.0
        %967 = vmatprep.subr.mxu0 0.0
        %968 = vmatpush1.msra.mxu0 0.0
        %969 = vmatprep.subr.mxu0 0.0
        %970 = vmatpush1.msra.mxu0 0.0
        %971 = vmatprep.subr.mxu0 0.0
        %972 = vmatpush1.msra.mxu0 0.0
        %973 = vmatprep.subr.mxu0 0.0
        %974 = vmatpush1.msra.mxu0 0.0
        %975 = vmatprep.subr.mxu0 0.0
        %976 = vmatpush1.msra.mxu0 0.0
        %977 = vmatprep.subr.mxu0 0.0
        %978 = vmatpush1.msra.mxu0 0.0
        %979 = vmatprep.subr.mxu0 0.0
        %980 = vmatpush1.msra.mxu0 0.0
        %981 = vmatprep.subr.mxu0 0.0
        %982 = vmatpush1.msra.mxu0 0.0
        %983 = vmatprep.subr.mxu0 0.0
        %984 = vmatpush1.msra.mxu0 0.0
        %985 = vmatprep.subr.mxu0 0.0
        %986 = vmatpush1.msra.mxu0 0.0
        %987 = vmatprep.subr.mxu0 0.0
        %988 = vmatpush1.msra.mxu0 0.0
        %989 = vmatprep.subr.mxu0 0.0
        %990 = vmatpush1.msra.mxu0 0.0
        %991 = vmatprep.subr.mxu0 0.0
        %992 = vmatpush1.msra.mxu0 0.0
        %993 = vmatprep.subr.mxu0 0.0
        %994 = vmatpush1.msra.mxu0 0.0
        %995 = vmatprep.subr.mxu0 0.0
        %996 = vmatpush1.msra.mxu0 0.0
        %997 = vmatprep.subr.mxu0 0.0
        %998 = vmatpush1.msra.mxu0 0.0
        %999 = vmatprep.subr.mxu0 0.0
        %1000 = vmatpush1.msra.mxu0 0.0
        %1001 = vmatprep.subr.mxu0 0.0
        %1002 = vmatpush1.msra.mxu0 0.0
        %1003 = vmatprep.subr.mxu0 0.0
        %1004 = vmatpush1.msra.mxu0 0.0
        %1005 = vmatprep.mubr.f32.mxu0 0.0
        %1006 = vmatmul.mubr.f32.gmra.mrb[0].mxu0 %v939
        %v1007 = vpop.f32.mrb[0].mxu0
        %v1008 = vadd.f32 0.0, %v1007
        %v1009 = vpop.f32.mrb[0].mxu0
        %1010 = vdwg.mxu0
        %v1011 = vadd.f32 %v938, %v1008
        %v1012 = vxor.u32 %v1011, 2147483648
        %v1013 = vmul.f32 %v1012, 1.442695
        %v1014 = vpow.pop %v1013
        %v1015 = vadd.f32 %v1014, 1.0
        %v1016 = vrcp.pop %v1015
        %v1017 = vmul.f32 1.0, %v1016
        %v1018 = vtanh.pop %v1011
        %v1019 = vmul.f32 %v1017, %v921
        %1021 = vrot.lane.b32.xlu0 %v1018, 32
        %v1022 = vpop.permute.xlu0 %1021
        %v1024 = vmul.f32 %v1017, %v1022
        %1026 = vrot.lane.b32.xlu0 %v1024, 32
        %v1027 = vpop.permute.xlu0 %1026
        %v1029 = vadd.f32 %v1019, %v1027
        %v1030 = vtanh.pop %v1029
        %1032 = vrot.lane.b32.xlu0 %v1030, 32
        %v1033 = vpop.permute.xlu0 %1032
        %v1035 = vmul.f32 %v1017, %v1033
        %1037 = vrot.lane.b32.xlu0 %v1035, 64
        %v1038 = vpop.permute.xlu0 %1037
        %s1040 = scalar_lea.vmem %s256, %s936 [#allocation9]
        %1041 = vst.msk [vmem:[%s1040] sm:$0x3] %vm394, %v1038
        %s1042 = smul.u32 %s27, 4294967289
        %s1043 = sadd.s32 %s1042, 7
        %s1044 = smul.u32 %s1043, 2
        %s1045 = scalar_lea.vmem %s222, %s1044 [#allocation4]
        %v1046 = vld [vmem:[%s1045] sm:$0x3]
        %v1047 = vsel %vm286, %v1038, 0
        %1049 = vmatprep.subr.mxu0 0.0
        %1050 = vmatpush1.msra.mxu0 %v276
        %1051 = vmatprep.subr.mxu0 0.0
        %1052 = vmatpush1.msra.mxu0 %v277
        %1053 = vmatprep.subr.mxu0 0.0
        %1054 = vmatpush1.msra.mxu0 %v278
        %1055 = vmatprep.subr.mxu0 0.0
        %1056 = vmatpush1.msra.mxu0 %v279
        %1057 = vmatprep.subr.mxu0 0.0
        %1058 = vmatpush1.msra.mxu0 0.0
        %1059 = vmatprep.subr.mxu0 0.0
        %1060 = vmatpush1.msra.mxu0 0.0
        %1061 = vmatprep.subr.mxu0 0.0
        %1062 = vmatpush1.msra.mxu0 0.0
        %1063 = vmatprep.subr.mxu0 0.0
        %1064 = vmatpush1.msra.mxu0 0.0
        %1065 = vmatprep.subr.mxu0 0.0
        %1066 = vmatpush1.msra.mxu0 0.0
        %1067 = vmatprep.subr.mxu0 0.0
        %1068 = vmatpush1.msra.mxu0 0.0
        %1069 = vmatprep.subr.mxu0 0.0
        %1070 = vmatpush1.msra.mxu0 0.0
        %1071 = vmatprep.subr.mxu0 0.0
        %1072 = vmatpush1.msra.mxu0 0.0
        %1073 = vmatprep.subr.mxu0 0.0
        %1074 = vmatpush1.msra.mxu0 0.0
        %1075 = vmatprep.subr.mxu0 0.0
        %1076 = vmatpush1.msra.mxu0 0.0
        %1077 = vmatprep.subr.mxu0 0.0
        %1078 = vmatpush1.msra.mxu0 0.0
        %1079 = vmatprep.subr.mxu0 0.0
        %1080 = vmatpush1.msra.mxu0 0.0
        %1081 = vmatprep.subr.mxu0 0.0
        %1082 = vmatpush1.msra.mxu0 0.0
        %1083 = vmatprep.subr.mxu0 0.0
        %1084 = vmatpush1.msra.mxu0 0.0
        %1085 = vmatprep.subr.mxu0 0.0
        %1086 = vmatpush1.msra.mxu0 0.0
        %1087 = vmatprep.subr.mxu0 0.0
        %1088 = vmatpush1.msra.mxu0 0.0
        %1089 = vmatprep.subr.mxu0 0.0
        %1090 = vmatpush1.msra.mxu0 0.0
        %1091 = vmatprep.subr.mxu0 0.0
        %1092 = vmatpush1.msra.mxu0 0.0
        %1093 = vmatprep.subr.mxu0 0.0
        %1094 = vmatpush1.msra.mxu0 0.0
        %1095 = vmatprep.subr.mxu0 0.0
        %1096 = vmatpush1.msra.mxu0 0.0
        %1097 = vmatprep.subr.mxu0 0.0
        %1098 = vmatpush1.msra.mxu0 0.0
        %1099 = vmatprep.subr.mxu0 0.0
        %1100 = vmatpush1.msra.mxu0 0.0
        %1101 = vmatprep.subr.mxu0 0.0
        %1102 = vmatpush1.msra.mxu0 0.0
        %1103 = vmatprep.subr.mxu0 0.0
        %1104 = vmatpush1.msra.mxu0 0.0
        %1105 = vmatprep.subr.mxu0 0.0
        %1106 = vmatpush1.msra.mxu0 0.0
        %1107 = vmatprep.subr.mxu0 0.0
        %1108 = vmatpush1.msra.mxu0 0.0
        %1109 = vmatprep.subr.mxu0 0.0
        %1110 = vmatpush1.msra.mxu0 0.0
        %1111 = vmatprep.subr.mxu0 0.0
        %1112 = vmatpush1.msra.mxu0 0.0
        %1113 = vmatprep.mubr.f32.mxu0 0.0
        %1114 = vmatmul.mubr.f32.gmra.mrb[0].mxu0 %v1047
        %v1115 = vpop.f32.mrb[0].mxu0
        %v1116 = vadd.f32 0.0, %v1115
        %v1117 = vpop.f32.mrb[0].mxu0
        %1118 = vdwg.mxu0
        %v1119 = vadd.f32 %v1046, %v1116
        %v1120 = vxor.u32 %v1119, 2147483648
        %v1121 = vmul.f32 %v1120, 1.442695
        %v1122 = vpow.pop %v1121
        %v1123 = vadd.f32 %v1122, 1.0
        %v1124 = vrcp.pop %v1123
        %v1125 = vmul.f32 1.0, %v1124
        %v1126 = vtanh.pop %v1119
        %v1127 = vmul.f32 %v1125, %v1029
        %1129 = vrot.lane.b32.xlu0 %v1126, 32
        %v1130 = vpop.permute.xlu0 %1129
        %v1132 = vmul.f32 %v1125, %v1130
        %1134 = vrot.lane.b32.xlu0 %v1132, 32
        %v1135 = vpop.permute.xlu0 %1134
        %v1137 = vadd.f32 %v1127, %v1135
        %v1138 = vtanh.pop %v1137
        %1140 = vrot.lane.b32.xlu0 %v1138, 32
        %v1141 = vpop.permute.xlu0 %1140
        %v1143 = vmul.f32 %v1125, %v1141
        %1145 = vrot.lane.b32.xlu0 %v1143, 64
        %v1146 = vpop.permute.xlu0 %1145
        %s1148 = scalar_lea.vmem %s256, %s1044 [#allocation9]
        %1149 = vst.msk [vmem:[%s1148] sm:$0x3] %vm394, %v1146
        %1150 = vst.msk [vmem:[#allocation2] sm:$0x3] %vm394, %v1146
        %1152 = vrot.lane.b32.xlu0 %v1137, 96
        %v1153 = vpop.permute.xlu0 %1152
        %1155 = vst.msk [vmem:[#allocation3] sm:$0x3] %vm394, %v1153
        %s1156 = sand.u32 %s129, 1
        %s1157 = scalar_lea.sflag [#allocation6], %s1156
        %s1158 = sand.u32 %s129, 1
        %s1159 = smul.addr %s1158, 16
        %s1160 = scalar_lea.vmem [#allocation9], %s1159
        // Predicated region
        $region41: #{tpu_custom_call.1} parent=27 // pred_check
          %p1161 = pneg %p139
        $region42: #{tpu_custom_call.1} parent=27 // pred_check_branch
          %1163 = sbr.rel (%p1161) target = $region44
        $region43: #{tpu_custom_call.1} parent=27 // pred_region
          %s1164 = ssub.s32 1, %s27
          %s1165 = smul.u32 %s29, %s1164
          %s1166 = ssub.s32 0, %s29
          %s1167 = smul.u32 %s1166, %s27
          %s1168 = sadd.s32 %s1165, %s1167
          %s1169 = smul.u32 8, %s1168
          %s1171 = ssub.s32 256, 256
          %1172 = vsyncadd %s1157, %s1171
          %s1173 = sadd.s32 %s28, %s1169
          %s1174 = smul.addr %s27, 8
          %s1175 = sadd.s32 %s1173, %s1174
          %s1176 = smul.addr %s1175, 32
          %s1177 = scalar_lea.hbm %s2, %s1176
          %s1178 = sshll.u32 %s1160, 4
          %s1179 = int_to_ptr.vmem [resolvable:$true] %s1178
          %1184 = dma.vmem_to_hbm [thread:$0]  %s1179, 256, %s1177, %s1157, 32, 32, 2
        $region44: #{tpu_custom_call.1} parent=27 // pred_fallthru
          _
      $region28: #{tpu_custom_call.1} parent=5 // pred_fallthru
        _
      %p1185 = scmp.le.s32.totalorder 2, %s17
      // Predicated region
      $region45: #{tpu_custom_call.1} parent=5 // pred_check
        %p1186 = pneg %p1185
      $region46: #{tpu_custom_call.1} parent=5 // pred_check_branch
        %1188 = sbr.rel (%p1186) target = $region48
      $region47: #{tpu_custom_call.1} parent=5 // pred_region
        %s1189 = ssub.s32 %s17, 2
        // Predicated region
        $region49: #{tpu_custom_call.1} parent=47 // pred_check
          %p1190 = pneg %p145
        $region50: #{tpu_custom_call.1} parent=47 // pred_check_branch
          %1192 = sbr.rel (%p1190) target = $region52
        $region51: #{tpu_custom_call.1} parent=47 // pred_region
          %s1193 = sand.u32 %s130, 1
          %s1194 = scalar_lea.sflag [#allocation6], %s1193
          %s1195 = sand.u32 %s130, 1
          %s1196 = smul.addr %s1195, 16
          %s1197 = scalar_lea.vmem [#allocation9], %s1196
          %1198 = dma.done %s1194, 256
        $region52: #{tpu_custom_call.1} parent=47 // pred_fallthru
          _
      $region48: #{tpu_custom_call.1} parent=5 // pred_fallthru
        _
    $region6: #{tpu_custom_call.1} parent=1 // loop_footer
      %s21 = sadd.s32 1, %s17
    $region7: #{tpu_custom_call.1} parent=1 // loop_footer_branch
      %16 = sbr.rel target = $region3
    $region8: #{tpu_custom_call.1} parent=1 // loop_exit
      _
    %1199 = vsyncpa [#allocation5], 1
    %s1200 = scalar_lea.sflag [#allocation5], 1
    %1201 = vsyncpa %s1200, 1
    %1202 = vsyncpa [#allocation8], 1
    %s1203 = scalar_lea.sflag [#allocation8], 1
    %1204 = vsyncpa %s1203, 1
    %1205 = vsyncpa [#allocation6], 1
    %s1206 = scalar_lea.sflag [#allocation6], 1
    %1207 = vsyncpa %s1206, 1

</llo_original>
